<compile_context>
chip_gen: v7x
topology: tpu7x:2x2x1
jax: 0.10.0
libtpu: 0.0.40
codegen_flags: <defaults>
</compile_context>

<pallas_src>
import jax
import jax.numpy as jnp
from jax import lax
from jax.experimental import pallas as pl
from jax.experimental.pallas import tpu as pltpu


def _round_up(x, m):
    return (x + m - 1) // m * m


def local_head_kernel(xcat_ref, w1_ref, scale_ref, shift_ref, w2_ref, b2_ref,
                      out_ref):
    # xcat_ref : (1, H+2, W, 3C)  bf16  kx-folded, zero-padded input plane
    # w1_ref   : (3, 3C, C5P)     bf16  fused 3x3 conv weights, K = kx*C + cin
    # scale_ref: (1, C5P)         f32   folded BN scale (0 in padded cols)
    # shift_ref: (1, C5P)         f32   folded BN shift (0 in padded cols)
    # w2_ref   : (C5P, OUT)       bf16  block-diagonal fused 1x1 weights
    # b2_ref   : (1, OUT)         f32   fused 1x1 bias
    # out_ref  : (1, OUT, TH*W)   f32   channel-minor packed output block
    W = xcat_ref.shape[2]
    C3 = xcat_ref.shape[3]
    C5P = w1_ref.shape[2]
    OUT = out_ref.shape[1]
    rows = out_ref.shape[2]
    TH = rows // W

    row_base = pl.multiple_of(pl.program_id(1) * TH, TH)

    def patch(ky):
        # (TH, W, 3C) window starting at padded row row_base+ky; with W a
        # multiple of 8 the flatten is a pure reinterpretation (no relayout).
        return xcat_ref[0, pl.ds(row_base + ky, TH), :, :].reshape(rows, C3)

    # conv3x3 (+folded BN + ReLU) and the fused block-diagonal 1x1 heads,
    # processed in 128-lane chunks of the padded 5C conv-output channels so
    # each f32 accumulator is a chained MXU accumulation held in registers.
    head = jnp.zeros((rows, OUT), jnp.float32)
    for lo in range(0, C5P, 128):
        acc = jnp.dot(patch(0), w1_ref[0, :, lo:lo + 128],
                      preferred_element_type=jnp.float32)
        acc = acc + jnp.dot(patch(1), w1_ref[1, :, lo:lo + 128],
                            preferred_element_type=jnp.float32)
        acc = acc + jnp.dot(patch(2), w1_ref[2, :, lo:lo + 128],
                            preferred_element_type=jnp.float32)
        y = jnp.maximum(acc * scale_ref[:, lo:lo + 128]
                        + shift_ref[:, lo:lo + 128], 0.0)
        head = head + jnp.dot(y.astype(jnp.bfloat16), w2_ref[lo:lo + 128, :],
                              preferred_element_type=jnp.float32)
    head = head + b2_ref[...]

    # Compact channel-minor layout: (rows, 8) -> (8, rows).  The transpose is
    # tiny and keeps the store lane-dense (rows is a multiple of 128).
    head_t = head.T

    # Per-channel activations on the 8 real channels only:
    #   0,1 sigmoid (heatmap) | 2 exp (inner wh) | 3,4 sigmoid (inner offset)
    #   5 identity (outer wh) | 6,7 sigmoid (outer offset)
    # (exp is evaluated on unselected rows too, but jnp.where never mixes
    #  branches, so no NaN can be produced.)
    ch = lax.broadcasted_iota(jnp.int32, head_t.shape, 0)
    sig = jax.nn.sigmoid(head_t)
    res = jnp.where(ch == 2, jnp.exp(head_t), jnp.where(ch == 5, head_t, sig))
    out_ref[0] = res.astype(out_ref.dtype)


def init_params(key, channel, num_classes=2):
    out_chs = [num_classes, 1, 2, 1, 2]
    params = []
    for h in range(5):
        key, k1, k2, k3, k4, k5, k6, k7 = jax.random.split(key, 8)
        params.append(dict(
            w1=jax.random.normal(k1, (3, 3, channel, channel), jnp.float32) * 0.05,  # HWIO
            gamma=1.0 + 0.1 * jax.random.normal(k2, (channel,), jnp.float32),
            beta=0.1 * jax.random.normal(k3, (channel,), jnp.float32),
            mean=0.1 * jax.random.normal(k4, (channel,), jnp.float32),
            var=1.0 + 0.1 * jnp.abs(jax.random.normal(k5, (channel,), jnp.float32)),
            w2=jax.random.normal(k6, (channel, out_chs[h]), jnp.float32) * 0.05,
            b2=0.1 * jax.random.normal(k7, (out_chs[h],), jnp.float32),
        ))
    return params, out_chs


def local_head_forward(x_nchw, params, out_chs):
    N, C, H, W = x_nchw.shape
    eps = 1e-5
    n_heads = len(params)
    C5 = n_heads * C
    C5P = _round_up(C5, 128)          # lane-granule padding (256 for C=32)
    OUT = sum(out_chs)                # 8 real output channels

    # Row block: TH*W ~= 256 fills the 256-wide MXU on v6e/v7x (one extra MXU
    # pass on v5e is negligible).  Keep the block pixel count a multiple of
    # 128 so the channel-minor store stays lane-dense; th == H (full plane per
    # block) is the always-legal fallback.
    cands = [th for th in range(1, H + 1)
             if H % th == 0 and ((th * W) % 128 == 0 or th == H)]
    TH = min(cands, key=lambda th: ((th * W) % 128 != 0, abs(th * W - 256)))
    rows = TH * W

    # NCHW -> NHWC, zero pad (padding=1), fold kx taps into the channel dim in
    # the wrapper (3x input footprint) so the kernel needs no im2col relayout:
    # xcat[..., kx*C + c] == xpad[..., kx:kx+W, c].
    x = jnp.transpose(x_nchw, (0, 2, 3, 1))
    xpad = jnp.pad(x, ((0, 0), (1, 1), (1, 1), (0, 0)))
    xcat = jnp.concatenate(
        [xpad[:, :, 0:W, :], xpad[:, :, 1:W + 1, :], xpad[:, :, 2:W + 2, :]],
        axis=-1).astype(jnp.bfloat16)                       # (N, H+2, W, 3C)

    # Fused 3x3 conv weights: concat heads along out channels, pad to C5P,
    # fold kx into K: (3,3,C,C5P) -> (3, 3C, C5P) with K index = kx*C + cin.
    w1 = jnp.concatenate([p['w1'] for p in params], axis=-1)   # (3,3,C,5C)
    w1 = jnp.pad(w1, ((0, 0), (0, 0), (0, 0), (0, C5P - C5)))
    w1r = w1.reshape(3, 3 * C, C5P).astype(jnp.bfloat16)

    # Eval-mode BN folded into scale/shift over the fused channels (zero pad).
    scale = jnp.concatenate([p['gamma'] / jnp.sqrt(p['var'] + eps) for p in params])
    shift = jnp.concatenate(
        [p['beta'] - p['mean'] * p['gamma'] / jnp.sqrt(p['var'] + eps) for p in params])
    scale = jnp.pad(scale, (0, C5P - C5)).reshape(1, C5P)
    shift = jnp.pad(shift, (0, C5P - C5)).reshape(1, C5P)

    # Block-diagonal fused 1x1 conv weight / bias (8 real output columns).
    w2 = jnp.zeros((C5P, OUT), jnp.float32)
    b2 = jnp.zeros((OUT,), jnp.float32)
    off = 0
    for h, p in enumerate(params):
        oc = out_chs[h]
        w2 = w2.at[h * C:(h + 1) * C, off:off + oc].set(p['w2'])
        b2 = b2.at[off:off + oc].set(p['b2'])
        off += oc
    w2 = w2.astype(jnp.bfloat16)
    b2 = b2.reshape(1, OUT)

    # Explicit VMEM budget from the actual block sizes (+ headroom).
    plane_b = (H + 2) * W * 3 * C * 2                  # bf16 kx-folded plane
    weights_b = 3 * 3 * C * C5P * 2 + C5P * OUT * 2 + (2 * C5P + OUT) * 4
    work_b = rows * C5P * 4 + rows * (3 * C) * 2 * 2 + rows * OUT * 4
    vmem_limit = min(2 * plane_b + 2 * rows * OUT * 4 + 2 * weights_b
                     + work_b + (8 << 20), 64 << 20)

    out = pl.pallas_call(
        local_head_kernel,
        out_shape=jax.ShapeDtypeStruct((N, OUT, H * W), jnp.float32),
        grid=(N, H // TH),
        in_specs=[
            # full kx-folded plane per batch element; block index is constant
            # along the inner h axis so it is DMA'd only once per n.
            pl.BlockSpec((1, H + 2, W, 3 * C), lambda n, h: (n, 0, 0, 0)),
            pl.BlockSpec((3, 3 * C, C5P), lambda n, h: (0, 0, 0)),
            pl.BlockSpec((1, C5P), lambda n, h: (0, 0)),
            pl.BlockSpec((1, C5P), lambda n, h: (0, 0)),
            pl.BlockSpec((C5P, OUT), lambda n, h: (0, 0)),
            pl.BlockSpec((1, OUT), lambda n, h: (0, 0)),
        ],
        out_specs=pl.BlockSpec((1, OUT, rows), lambda n, h: (n, 0, h)),
        compiler_params=pltpu.CompilerParams(
            dimension_semantics=("parallel", "parallel"),
            vmem_limit_bytes=int(vmem_limit)),
    )(xcat, w1r, scale, shift, w2, b2)

    # Kernel output is already channel-minor NCHW-flat: just reshape & split.
    out = out.reshape(N, OUT, H, W)
    heatmap = out[:, 0:2]
    inner_branch = {'wh': out[:, 2:3], 'offset': out[:, 3:5]}
    outer_branch = {'wh': out[:, 5:6], 'offset': out[:, 6:8]}
    return heatmap, inner_branch, outer_branch


def reference_forward(x, params, out_chs, eps=1e-5):
    """Pure-JAX f32 reference matching the PyTorch module (eval-mode BN)."""
    outs = []
    for p in params:
        z = lax.conv_general_dilated(
            x, p['w1'], window_strides=(1, 1), padding='SAME',
            dimension_numbers=('NCHW', 'HWIO', 'NCHW'))
        inv = p['gamma'] / jnp.sqrt(p['var'] + eps)
        z = z * inv[None, :, None, None] \
            + (p['beta'] - p['mean'] * inv)[None, :, None, None]
        z = jnp.maximum(z, 0.0)
        z = jnp.einsum('nchw,co->nohw', z, p['w2']) + p['b2'][None, :, None, None]
        outs.append(z)
    heatmap = jax.nn.sigmoid(outs[0])
    inner = {'wh': jnp.exp(outs[1]), 'offset': jax.nn.sigmoid(outs[2])}
    outer = {'wh': outs[3], 'offset': jax.nn.sigmoid(outs[4])}
    return heatmap, inner, outer


if __name__ == "__main__":
    key = jax.random.PRNGKey(0)
    k_param, k_x = jax.random.split(key)

    N, C, H, W = 2, 32, 16, 16            # small shapes (module default channel=64)
    params, out_chs = init_params(k_param, C, num_classes=2)
    x = jax.random.normal(k_x, (N, C, H, W), jnp.float32)

    @jax.jit
    def run(xx):
        return local_head_forward(xx, params, out_chs)

    heatmap, inner, outer = run(x)
    jax.block_until_ready((heatmap, inner['wh'], inner['offset'],
                           outer['wh'], outer['offset']))

    assert heatmap.shape == (N, 2, H, W)
    assert inner['wh'].shape == (N, 1, H, W)
    assert inner['offset'].shape == (N, 2, H, W)
    assert outer['wh'].shape == (N, 1, H, W)
    assert outer['offset'].shape == (N, 2, H, W)

    # numerical sanity check vs. f32 reference (kernel uses bf16 matmul operands)
    r_hm, r_in, r_out = reference_forward(x, params, out_chs)
    for got, ref in [(heatmap, r_hm), (inner['wh'], r_in['wh']),
                     (inner['offset'], r_in['offset']),
                     (outer['wh'], r_out['wh']),
                     (outer['offset'], r_out['offset'])]:
        assert jnp.allclose(got, ref, rtol=5e-2, atol=5e-2), \
            float(jnp.max(jnp.abs(got - ref)))

    print("KERNEL_OK")
</pallas_src>

<mosaic_0001>
module attributes {stable_mosaic.version = 11 : i64} {
  func.func @local_head_kernel(%arg0: i32, %arg1: i32, %arg2: memref<1x18x16x96xbf16, #tpu.memory_space<vmem>>, %arg3: memref<3x96x256xbf16, #tpu.memory_space<vmem>>, %arg4: memref<1x256xf32, #tpu.memory_space<vmem>>, %arg5: memref<1x256xf32, #tpu.memory_space<vmem>>, %arg6: memref<256x8xbf16, #tpu.memory_space<vmem>>, %arg7: memref<1x8xf32, #tpu.memory_space<vmem>>, %arg8: memref<1x8x256xf32, #tpu.memory_space<vmem>>) attributes {dimension_semantics = [#tpu.dimension_semantics<parallel>, #tpu.dimension_semantics<parallel>], iteration_bounds = array<i64: 2, 1>, scalar_prefetch = 0 : i64, scratch_operands = 0 : i64, tpu.core_type = #tpu.core_type<tc>, window_params = [{transform_indices = @transform_0, window_bounds = array<i64: 1, 18, 16, 96>}, {pipeline_mode = #tpu.pipeline_mode<synchronous>, transform_indices = @transform_1, window_bounds = array<i64: 3, 96, 256>}, {pipeline_mode = #tpu.pipeline_mode<synchronous>, transform_indices = @transform_2, window_bounds = array<i64: 1, 256>}, {pipeline_mode = #tpu.pipeline_mode<synchronous>, transform_indices = @transform_3, window_bounds = array<i64: 1, 256>}, {pipeline_mode = #tpu.pipeline_mode<synchronous>, transform_indices = @transform_4, window_bounds = array<i64: 256, 8>}, {pipeline_mode = #tpu.pipeline_mode<synchronous>, transform_indices = @transform_5, window_bounds = array<i64: 1, 8>}, {transform_indices = @transform_6, window_bounds = array<i64: 1, 8, 256>}]} {
    %c16_i32 = arith.constant 16 : i32
    %0 = arith.muli %arg1, %c16_i32 : i32
    %1 = tpu.assume_multiple %0, 16 : i32
    %cst = arith.constant 0.000000e+00 : f32
    %2 = vector.broadcast %cst : f32 to vector<256x8xf32>
    %c0_i32 = arith.constant 0 : i32
    %3 = arith.addi %1, %c0_i32 : i32
    %c0 = arith.constant 0 : index
    %4 = arith.index_cast %3 : i32 to index
    %c0_0 = arith.constant 0 : index
    %c0_1 = arith.constant 0 : index
    %5 = vector.load %arg2[%c0, %4, %c0_0, %c0_1] : memref<1x18x16x96xbf16, #tpu.memory_space<vmem>>, vector<1x16x16x96xbf16>
    %6 = vector.shape_cast %5 : vector<1x16x16x96xbf16> to vector<16x16x96xbf16>
    %7 = vector.shape_cast %6 : vector<16x16x96xbf16> to vector<256x96xbf16>
    %c0_2 = arith.constant 0 : index
    %c0_3 = arith.constant 0 : index
    %c0_4 = arith.constant 0 : index
    %8 = vector.load %arg3[%c0_2, %c0_3, %c0_4] : memref<3x96x256xbf16, #tpu.memory_space<vmem>>, vector<1x96x128xbf16>
    %9 = vector.shape_cast %8 : vector<1x96x128xbf16> to vector<96x128xbf16>
    %cst_5 = arith.constant dense<0.000000e+00> : vector<256x128xf32>
    %10 = tpu.matmul %7, %9, %cst_5 {dimension_numbers = #tpu.dot_dimension_numbers<[1], [0], [0], [1], [0, 0, 1, 1], [], []>} : vector<256x96xbf16>, vector<96x128xbf16>, vector<256x128xf32> -> vector<256x128xf32>
    %c1_i32 = arith.constant 1 : i32
    %11 = arith.addi %1, %c1_i32 : i32
    %c0_6 = arith.constant 0 : index
    %12 = arith.index_cast %11 : i32 to index
    %c0_7 = arith.constant 0 : index
    %c0_8 = arith.constant 0 : index
    %13 = vector.load %arg2[%c0_6, %12, %c0_7, %c0_8] : memref<1x18x16x96xbf16, #tpu.memory_space<vmem>>, vector<1x16x16x96xbf16>
    %14 = vector.shape_cast %13 : vector<1x16x16x96xbf16> to vector<16x16x96xbf16>
    %15 = vector.shape_cast %14 : vector<16x16x96xbf16> to vector<256x96xbf16>
    %c1 = arith.constant 1 : index
    %c0_9 = arith.constant 0 : index
    %c0_10 = arith.constant 0 : index
    %16 = vector.load %arg3[%c1, %c0_9, %c0_10] : memref<3x96x256xbf16, #tpu.memory_space<vmem>>, vector<1x96x128xbf16>
    %17 = vector.shape_cast %16 : vector<1x96x128xbf16> to vector<96x128xbf16>
    %cst_11 = arith.constant dense<0.000000e+00> : vector<256x128xf32>
    %18 = tpu.matmul %15, %17, %cst_11 {dimension_numbers = #tpu.dot_dimension_numbers<[1], [0], [0], [1], [0, 0, 1, 1], [], []>} : vector<256x96xbf16>, vector<96x128xbf16>, vector<256x128xf32> -> vector<256x128xf32>
    %19 = arith.addf %10, %18 : vector<256x128xf32>
    %c2_i32 = arith.constant 2 : i32
    %20 = arith.addi %1, %c2_i32 : i32
    %c0_12 = arith.constant 0 : index
    %21 = arith.index_cast %20 : i32 to index
    %c0_13 = arith.constant 0 : index
    %c0_14 = arith.constant 0 : index
    %22 = vector.load %arg2[%c0_12, %21, %c0_13, %c0_14] : memref<1x18x16x96xbf16, #tpu.memory_space<vmem>>, vector<1x16x16x96xbf16>
    %23 = vector.shape_cast %22 : vector<1x16x16x96xbf16> to vector<16x16x96xbf16>
    %24 = vector.shape_cast %23 : vector<16x16x96xbf16> to vector<256x96xbf16>
    %c2 = arith.constant 2 : index
    %c0_15 = arith.constant 0 : index
    %c0_16 = arith.constant 0 : index
    %25 = vector.load %arg3[%c2, %c0_15, %c0_16] : memref<3x96x256xbf16, #tpu.memory_space<vmem>>, vector<1x96x128xbf16>
    %26 = vector.shape_cast %25 : vector<1x96x128xbf16> to vector<96x128xbf16>
    %cst_17 = arith.constant dense<0.000000e+00> : vector<256x128xf32>
    %27 = tpu.matmul %24, %26, %cst_17 {dimension_numbers = #tpu.dot_dimension_numbers<[1], [0], [0], [1], [0, 0, 1, 1], [], []>} : vector<256x96xbf16>, vector<96x128xbf16>, vector<256x128xf32> -> vector<256x128xf32>
    %28 = arith.addf %19, %27 : vector<256x128xf32>
    %c0_18 = arith.constant 0 : index
    %c0_19 = arith.constant 0 : index
    %29 = vector.load %arg4[%c0_18, %c0_19] : memref<1x256xf32, #tpu.memory_space<vmem>>, vector<1x128xf32>
    %30 = vector.broadcast %29 : vector<1x128xf32> to vector<256x128xf32>
    %31 = arith.mulf %28, %30 : vector<256x128xf32>
    %c0_20 = arith.constant 0 : index
    %c0_21 = arith.constant 0 : index
    %32 = vector.load %arg5[%c0_20, %c0_21] : memref<1x256xf32, #tpu.memory_space<vmem>>, vector<1x128xf32>
    %33 = vector.broadcast %32 : vector<1x128xf32> to vector<256x128xf32>
    %34 = arith.addf %31, %33 : vector<256x128xf32>
    %cst_22 = arith.constant 0.000000e+00 : f32
    %35 = vector.broadcast %cst_22 : f32 to vector<256x128xf32>
    %36 = arith.maximumf %34, %35 : vector<256x128xf32>
    %37 = arith.truncf %36 : vector<256x128xf32> to vector<256x128xbf16>
    %c0_23 = arith.constant 0 : index
    %c0_24 = arith.constant 0 : index
    %38 = vector.load %arg6[%c0_23, %c0_24] : memref<256x8xbf16, #tpu.memory_space<vmem>>, vector<128x8xbf16>
    %cst_25 = arith.constant dense<0.000000e+00> : vector<256x8xf32>
    %39 = tpu.matmul %37, %38, %cst_25 {dimension_numbers = #tpu.dot_dimension_numbers<[1], [0], [0], [1], [0, 0, 1, 1], [], []>} : vector<256x128xbf16>, vector<128x8xbf16>, vector<256x8xf32> -> vector<256x8xf32>
    %40 = arith.addf %2, %39 : vector<256x8xf32>
    %c0_i32_26 = arith.constant 0 : i32
    %41 = arith.addi %1, %c0_i32_26 : i32
    %c0_27 = arith.constant 0 : index
    %42 = arith.index_cast %41 : i32 to index
    %c0_28 = arith.constant 0 : index
    %c0_29 = arith.constant 0 : index
    %43 = vector.load %arg2[%c0_27, %42, %c0_28, %c0_29] : memref<1x18x16x96xbf16, #tpu.memory_space<vmem>>, vector<1x16x16x96xbf16>
    %44 = vector.shape_cast %43 : vector<1x16x16x96xbf16> to vector<16x16x96xbf16>
    %45 = vector.shape_cast %44 : vector<16x16x96xbf16> to vector<256x96xbf16>
    %c0_30 = arith.constant 0 : index
    %c0_31 = arith.constant 0 : index
    %c128 = arith.constant 128 : index
    %46 = vector.load %arg3[%c0_30, %c0_31, %c128] : memref<3x96x256xbf16, #tpu.memory_space<vmem>>, vector<1x96x128xbf16>
    %47 = vector.shape_cast %46 : vector<1x96x128xbf16> to vector<96x128xbf16>
    %cst_32 = arith.constant dense<0.000000e+00> : vector<256x128xf32>
    %48 = tpu.matmul %45, %47, %cst_32 {dimension_numbers = #tpu.dot_dimension_numbers<[1], [0], [0], [1], [0, 0, 1, 1], [], []>} : vector<256x96xbf16>, vector<96x128xbf16>, vector<256x128xf32> -> vector<256x128xf32>
    %c1_i32_33 = arith.constant 1 : i32
    %49 = arith.addi %1, %c1_i32_33 : i32
    %c0_34 = arith.constant 0 : index
    %50 = arith.index_cast %49 : i32 to index
    %c0_35 = arith.constant 0 : index
    %c0_36 = arith.constant 0 : index
    %51 = vector.load %arg2[%c0_34, %50, %c0_35, %c0_36] : memref<1x18x16x96xbf16, #tpu.memory_space<vmem>>, vector<1x16x16x96xbf16>
    %52 = vector.shape_cast %51 : vector<1x16x16x96xbf16> to vector<16x16x96xbf16>
    %53 = vector.shape_cast %52 : vector<16x16x96xbf16> to vector<256x96xbf16>
    %c1_37 = arith.constant 1 : index
    %c0_38 = arith.constant 0 : index
    %c128_39 = arith.constant 128 : index
    %54 = vector.load %arg3[%c1_37, %c0_38, %c128_39] : memref<3x96x256xbf16, #tpu.memory_space<vmem>>, vector<1x96x128xbf16>
    %55 = vector.shape_cast %54 : vector<1x96x128xbf16> to vector<96x128xbf16>
    %cst_40 = arith.constant dense<0.000000e+00> : vector<256x128xf32>
    %56 = tpu.matmul %53, %55, %cst_40 {dimension_numbers = #tpu.dot_dimension_numbers<[1], [0], [0], [1], [0, 0, 1, 1], [], []>} : vector<256x96xbf16>, vector<96x128xbf16>, vector<256x128xf32> -> vector<256x128xf32>
    %57 = arith.addf %48, %56 : vector<256x128xf32>
    %c2_i32_41 = arith.constant 2 : i32
    %58 = arith.addi %1, %c2_i32_41 : i32
    %c0_42 = arith.constant 0 : index
    %59 = arith.index_cast %58 : i32 to index
    %c0_43 = arith.constant 0 : index
    %c0_44 = arith.constant 0 : index
    %60 = vector.load %arg2[%c0_42, %59, %c0_43, %c0_44] : memref<1x18x16x96xbf16, #tpu.memory_space<vmem>>, vector<1x16x16x96xbf16>
    %61 = vector.shape_cast %60 : vector<1x16x16x96xbf16> to vector<16x16x96xbf16>
    %62 = vector.shape_cast %61 : vector<16x16x96xbf16> to vector<256x96xbf16>
    %c2_45 = arith.constant 2 : index
    %c0_46 = arith.constant 0 : index
    %c128_47 = arith.constant 128 : index
    %63 = vector.load %arg3[%c2_45, %c0_46, %c128_47] : memref<3x96x256xbf16, #tpu.memory_space<vmem>>, vector<1x96x128xbf16>
    %64 = vector.shape_cast %63 : vector<1x96x128xbf16> to vector<96x128xbf16>
    %cst_48 = arith.constant dense<0.000000e+00> : vector<256x128xf32>
    %65 = tpu.matmul %62, %64, %cst_48 {dimension_numbers = #tpu.dot_dimension_numbers<[1], [0], [0], [1], [0, 0, 1, 1], [], []>} : vector<256x96xbf16>, vector<96x128xbf16>, vector<256x128xf32> -> vector<256x128xf32>
    %66 = arith.addf %57, %65 : vector<256x128xf32>
    %c0_49 = arith.constant 0 : index
    %c128_50 = arith.constant 128 : index
    %67 = vector.load %arg4[%c0_49, %c128_50] : memref<1x256xf32, #tpu.memory_space<vmem>>, vector<1x128xf32>
    %68 = vector.broadcast %67 : vector<1x128xf32> to vector<256x128xf32>
    %69 = arith.mulf %66, %68 : vector<256x128xf32>
    %c0_51 = arith.constant 0 : index
    %c128_52 = arith.constant 128 : index
    %70 = vector.load %arg5[%c0_51, %c128_52] : memref<1x256xf32, #tpu.memory_space<vmem>>, vector<1x128xf32>
    %71 = vector.broadcast %70 : vector<1x128xf32> to vector<256x128xf32>
    %72 = arith.addf %69, %71 : vector<256x128xf32>
    %cst_53 = arith.constant 0.000000e+00 : f32
    %73 = vector.broadcast %cst_53 : f32 to vector<256x128xf32>
    %74 = arith.maximumf %72, %73 : vector<256x128xf32>
    %75 = arith.truncf %74 : vector<256x128xf32> to vector<256x128xbf16>
    %c128_54 = arith.constant 128 : index
    %c0_55 = arith.constant 0 : index
    %76 = vector.load %arg6[%c128_54, %c0_55] : memref<256x8xbf16, #tpu.memory_space<vmem>>, vector<128x8xbf16>
    %cst_56 = arith.constant dense<0.000000e+00> : vector<256x8xf32>
    %77 = tpu.matmul %75, %76, %cst_56 {dimension_numbers = #tpu.dot_dimension_numbers<[1], [0], [0], [1], [0, 0, 1, 1], [], []>} : vector<256x128xbf16>, vector<128x8xbf16>, vector<256x8xf32> -> vector<256x8xf32>
    %78 = arith.addf %40, %77 : vector<256x8xf32>
    %c0_57 = arith.constant 0 : index
    %c0_58 = arith.constant 0 : index
    %79 = vector.load %arg7[%c0_57, %c0_58] : memref<1x8xf32, #tpu.memory_space<vmem>>, vector<1x8xf32>
    %80 = vector.broadcast %79 : vector<1x8xf32> to vector<256x8xf32>
    %81 = arith.addf %78, %80 : vector<256x8xf32>
    %82 = tpu.transpose %81, [1, 0] : vector<256x8xf32> -> vector<8x256xf32>
    %83 = tpu.iota {dimensions = array<i32: 0>} : vector<8x256xi32>
    %84 = arith.negf %82 : vector<8x256xf32>
    %85 = math.exp %84 : vector<8x256xf32>
    %cst_59 = arith.constant 1.000000e+00 : f32
    %86 = vector.broadcast %cst_59 : f32 to vector<8x256xf32>
    %87 = arith.addf %86, %85 : vector<8x256xf32>
    %88 = arith.divf %86, %87 : vector<8x256xf32>
    %c2_i32_60 = arith.constant 2 : i32
    %89 = vector.broadcast %c2_i32_60 : i32 to vector<8x256xi32>
    %90 = arith.cmpi eq, %83, %89 : vector<8x256xi32>
    %91 = math.exp %82 : vector<8x256xf32>
    %c5_i32 = arith.constant 5 : i32
    %92 = vector.broadcast %c5_i32 : i32 to vector<8x256xi32>
    %93 = arith.cmpi eq, %83, %92 : vector<8x256xi32>
    %94 = arith.select %93, %82, %88 : vector<8x256xi1>, vector<8x256xf32>
    %95 = arith.select %90, %91, %94 : vector<8x256xi1>, vector<8x256xf32>
    %c0_61 = arith.constant 0 : index
    %c0_62 = arith.constant 0 : index
    %c0_63 = arith.constant 0 : index
    %96 = vector.load %arg8[%c0_61, %c0_62, %c0_63] : memref<1x8x256xf32, #tpu.memory_space<vmem>>, vector<1x8x256xf32>
    %97 = vector.shape_cast %96 : vector<1x8x256xf32> to vector<8x256xf32>
    %98 = vector.shape_cast %95 : vector<8x256xf32> to vector<1x8x256xf32>
    tpu.vector_store %arg8[%c0_61, %c0_62, %c0_63], %98 {strides = array<i32>} : memref<1x8x256xf32, #tpu.memory_space<vmem>>, vector<1x8x256xf32>,
    return
  }
  func.func @transform_0(%arg0: i32, %arg1: i32) -> (i32, i32, i32, i32) {
    %c0_i32 = arith.constant 0 : i32
    %c0_i32_0 = arith.constant 0 : i32
    %c0_i32_1 = arith.constant 0 : i32
    %c0_i32_2 = arith.constant 0 : i32
    return %arg0, %c0_i32, %c0_i32_0, %c0_i32_1 : i32, i32, i32, i32
  }
  func.func @transform_1(%arg0: i32, %arg1: i32) -> (i32, i32, i32) {
    %c0_i32 = arith.constant 0 : i32
    %c0_i32_0 = arith.constant 0 : i32
    %c0_i32_1 = arith.constant 0 : i32
    %c0_i32_2 = arith.constant 0 : i32
    return %c0_i32, %c0_i32_0, %c0_i32_1 : i32, i32, i32
  }
  func.func @transform_2(%arg0: i32, %arg1: i32) -> (i32, i32) {
    %c0_i32 = arith.constant 0 : i32
    %c0_i32_0 = arith.constant 0 : i32
    %c0_i32_1 = arith.constant 0 : i32
    return %c0_i32, %c0_i32_0 : i32, i32
  }
  func.func @transform_3(%arg0: i32, %arg1: i32) -> (i32, i32) {
    %c0_i32 = arith.constant 0 : i32
    %c0_i32_0 = arith.constant 0 : i32
    %c0_i32_1 = arith.constant 0 : i32
    return %c0_i32, %c0_i32_0 : i32, i32
  }
  func.func @transform_4(%arg0: i32, %arg1: i32) -> (i32, i32) {
    %c0_i32 = arith.constant 0 : i32
    %c0_i32_0 = arith.constant 0 : i32
    %c0_i32_1 = arith.constant 0 : i32
    return %c0_i32, %c0_i32_0 : i32, i32
  }
  func.func @transform_5(%arg0: i32, %arg1: i32) -> (i32, i32) {
    %c0_i32 = arith.constant 0 : i32
    %c0_i32_0 = arith.constant 0 : i32
    %c0_i32_1 = arith.constant 0 : i32
    return %c0_i32, %c0_i32_0 : i32, i32
  }
  func.func @transform_6(%arg0: i32, %arg1: i32) -> (i32, i32, i32) {
    %c0_i32 = arith.constant 0 : i32
    %c0_i32_0 = arith.constant 0 : i32
    return %arg0, %c0_i32, %arg1 : i32, i32, i32
  }
}

</mosaic_0001>

<llo_original>
// kernel: run.1
$region0: #{run.1}
  #allocation0 [shape = 'u32[]', space=smem, size = 0x4, offset = 0x4, fixed_abs, tag = 'smem constant byte address 0x4 - core index']
  #allocation1 [shape = 'u32[144,128]{1,0:T(1,128)}', space=vmem, size = 0x12000, scoped, tag = 'internal scratch']
  %s0 = inlined_call_operand.vmem [shape: bf16[2,18,16,96], index: 0, kind: input, shape index: {}]
  %s1 = inlined_call_operand.vmem [shape: bf16[3,96,256], index: 1, kind: input, shape index: {}]
  %s2 = inlined_call_operand.vmem [shape: f32[1,256], index: 2, kind: input, shape index: {}]
  %s3 = inlined_call_operand.vmem [shape: f32[1,256], index: 3, kind: input, shape index: {}]
  %s4 = inlined_call_operand.vmem [shape: bf16[256,8], index: 4, kind: input, shape index: {}]
  %s5 = inlined_call_operand.vmem [shape: f32[1,8], index: 5, kind: input, shape index: {}]
  %s6 = inlined_call_operand.vmem [shape: f32[2,8,256], index: 6, kind: output, shape index: {}]
  %s7 = sld [smem:[#allocation0]]
  $region57: #{run.1} parent=0
    _
  %s9 = ssub.s32 1, %s7
  %s10 = scalar_select 0, %s9, %s7
  loop: start=0, step=1, limit=4
  $region2: #{run.1} parent=0 // loop_pre_header
    _
  $region3: #{run.1} parent=0 // loop_header
    %s12 = sphi 0, %s16
    %p13 = scmp.ge.s32.totalorder %s12, 4
    %s19 = sphi 0, %s31
    %s20 = sphi 0, %s27
    %s21 = sphi 0, %s19
    %s22 = sphi 0, %s20
    %s23 = sphi 0, %s21
    %s24 = sphi 0, %s22
    %s34 = sphi 0, %s36
    %s37 = sphi 0, %s34
    %s38 = sphi 0, %s37
    %s54 = sphi 0, %s38
    %s58 = sphi 0, %s58
    %s60 = sphi 0, %s58
    %s61 = sphi 0, %s60
    %s75 = sphi 0, %s61
    %s79 = sphi 0, %s79
    %s81 = sphi 0, %s79
    %s82 = sphi 0, %s81
    %s96 = sphi 0, %s82
    %s100 = sphi 0, %s100
    %s102 = sphi 0, %s100
    %s103 = sphi 0, %s102
    %s117 = sphi 0, %s103
    %s121 = sphi 0, %s121
    %s123 = sphi 0, %s121
    %s124 = sphi 0, %s123
    %s138 = sphi 0, %s124
    %s142 = sphi 0, %s142
    %s144 = sphi 0, %s142
    %s145 = sphi 0, %s144
    %s159 = sphi 0, %s145
    %s167 = sphi 0, %s169
    %s170 = sphi 0, %s167
    %s171 = sphi 0, %s170
    %s187 = sphi 0, %s171
  $region4: #{run.1} parent=0 // loop_header_branch
    %15 = sbr.rel (%p13) target = $region8
  $region5: #{run.1} parent=0 // loop_body
    %s17 = ssub.s32 %s12, 1
    %s18 = ssub.s32 %s12, 2
    %s25 = sadd.s32 1, %s20
    %p26 = scmp.ge.s32.totalorder %s25, 1
    %s27 = scalar_select %p26, 0, %s25
    %s28 = sadd.s32 1, %s19
    %s29 = scalar_select %p26, %s28, %s19
    %p30 = scmp.ge.s32.totalorder %s29, 2
    %s31 = scalar_select %p30, 0, %s29
    %s32 = ssub.s32 %s19, %s31
    %p33 = scmp.eq.s32.totalorder %s32, 0
    %s35 = sadd.s32 %s34, 1
    %s36 = scalar_select %p33, %s34, %s35
    %p39 = pneg %p33
    %p40 = scmp.eq.s32.totalorder %s12, 1
    %p41 = por %p39, %p40
    %p42 = scmp.ne.s32.totalorder %s34, %s37
    %p43 = scmp.eq.s32.totalorder %s12, 0
    %p44 = por %p42, %p43
    %p45 = scmp.ne.s32.totalorder %s34, %s37
    %p46 = scmp.eq.s32.totalorder %s17, 1
    %p47 = por %p45, %p46
    %p48 = scmp.ne.s32.totalorder %s37, %s38
    %p49 = scmp.eq.s32.totalorder %s17, 0
    %p50 = por %p48, %p49
    %p51 = scmp.ne.s32.totalorder %s37, %s38
    %p52 = scmp.eq.s32.totalorder %s18, 1
    %p53 = por %p51, %p52
    %p55 = scmp.ne.s32.totalorder %s38, %s54
    %p56 = scmp.eq.s32.totalorder %s18, 0
    %p57 = por %p55, %p56
    %s59 = sadd.s32 %s58, 1
    %p62 = scmp.eq.s32.totalorder %s12, 1
    %p63 = scmp.ne.s32.totalorder %s58, %s60
    %p64 = scmp.eq.s32.totalorder %s12, 0
    %p65 = por %p63, %p64
    %p66 = scmp.ne.s32.totalorder %s58, %s60
    %p67 = scmp.eq.s32.totalorder %s17, 1
    %p68 = por %p66, %p67
    %p69 = scmp.ne.s32.totalorder %s60, %s61
    %p70 = scmp.eq.s32.totalorder %s17, 0
    %p71 = por %p69, %p70
    %p72 = scmp.ne.s32.totalorder %s60, %s61
    %p73 = scmp.eq.s32.totalorder %s18, 1
    %p74 = por %p72, %p73
    %p76 = scmp.ne.s32.totalorder %s61, %s75
    %p77 = scmp.eq.s32.totalorder %s18, 0
    %p78 = por %p76, %p77
    %s80 = sadd.s32 %s79, 1
    %p83 = scmp.eq.s32.totalorder %s12, 1
    %p84 = scmp.ne.s32.totalorder %s79, %s81
    %p85 = scmp.eq.s32.totalorder %s12, 0
    %p86 = por %p84, %p85
    %p87 = scmp.ne.s32.totalorder %s79, %s81
    %p88 = scmp.eq.s32.totalorder %s17, 1
    %p89 = por %p87, %p88
    %p90 = scmp.ne.s32.totalorder %s81, %s82
    %p91 = scmp.eq.s32.totalorder %s17, 0
    %p92 = por %p90, %p91
    %p93 = scmp.ne.s32.totalorder %s81, %s82
    %p94 = scmp.eq.s32.totalorder %s18, 1
    %p95 = por %p93, %p94
    %p97 = scmp.ne.s32.totalorder %s82, %s96
    %p98 = scmp.eq.s32.totalorder %s18, 0
    %p99 = por %p97, %p98
    %s101 = sadd.s32 %s100, 1
    %p104 = scmp.eq.s32.totalorder %s12, 1
    %p105 = scmp.ne.s32.totalorder %s100, %s102
    %p106 = scmp.eq.s32.totalorder %s12, 0
    %p107 = por %p105, %p106
    %p108 = scmp.ne.s32.totalorder %s100, %s102
    %p109 = scmp.eq.s32.totalorder %s17, 1
    %p110 = por %p108, %p109
    %p111 = scmp.ne.s32.totalorder %s102, %s103
    %p112 = scmp.eq.s32.totalorder %s17, 0
    %p113 = por %p111, %p112
    %p114 = scmp.ne.s32.totalorder %s102, %s103
    %p115 = scmp.eq.s32.totalorder %s18, 1
    %p116 = por %p114, %p115
    %p118 = scmp.ne.s32.totalorder %s103, %s117
    %p119 = scmp.eq.s32.totalorder %s18, 0
    %p120 = por %p118, %p119
    %s122 = sadd.s32 %s121, 1
    %p125 = scmp.eq.s32.totalorder %s12, 1
    %p126 = scmp.ne.s32.totalorder %s121, %s123
    %p127 = scmp.eq.s32.totalorder %s12, 0
    %p128 = por %p126, %p127
    %p129 = scmp.ne.s32.totalorder %s121, %s123
    %p130 = scmp.eq.s32.totalorder %s17, 1
    %p131 = por %p129, %p130
    %p132 = scmp.ne.s32.totalorder %s123, %s124
    %p133 = scmp.eq.s32.totalorder %s17, 0
    %p134 = por %p132, %p133
    %p135 = scmp.ne.s32.totalorder %s123, %s124
    %p136 = scmp.eq.s32.totalorder %s18, 1
    %p137 = por %p135, %p136
    %p139 = scmp.ne.s32.totalorder %s124, %s138
    %p140 = scmp.eq.s32.totalorder %s18, 0
    %p141 = por %p139, %p140
    %s143 = sadd.s32 %s142, 1
    %p146 = scmp.eq.s32.totalorder %s12, 1
    %p147 = scmp.ne.s32.totalorder %s142, %s144
    %p148 = scmp.eq.s32.totalorder %s12, 0
    %p149 = por %p147, %p148
    %p150 = scmp.ne.s32.totalorder %s142, %s144
    %p151 = scmp.eq.s32.totalorder %s17, 1
    %p152 = por %p150, %p151
    %p153 = scmp.ne.s32.totalorder %s144, %s145
    %p154 = scmp.eq.s32.totalorder %s17, 0
    %p155 = por %p153, %p154
    %p156 = scmp.ne.s32.totalorder %s144, %s145
    %p157 = scmp.eq.s32.totalorder %s18, 1
    %p158 = por %p156, %p157
    %p160 = scmp.ne.s32.totalorder %s145, %s159
    %p161 = scmp.eq.s32.totalorder %s18, 0
    %p162 = por %p160, %p161
    %s163 = ssub.s32 %s19, %s31
    %s164 = ssub.s32 %s20, %s27
    %s165 = sor.u32 %s163, %s164
    %p166 = scmp.eq.s32.totalorder %s165, 0
    %s168 = sadd.s32 %s167, 1
    %s169 = scalar_select %p166, %s167, %s168
    %p172 = pneg %p166
    %p173 = scmp.eq.s32.totalorder %s12, 1
    %p174 = por %p172, %p173
    %p175 = scmp.ne.s32.totalorder %s167, %s170
    %p176 = scmp.eq.s32.totalorder %s12, 0
    %p177 = por %p175, %p176
    %p178 = scmp.ne.s32.totalorder %s167, %s170
    %p179 = scmp.eq.s32.totalorder %s17, 1
    %p180 = por %p178, %p179
    %p181 = scmp.ne.s32.totalorder %s170, %s171
    %p182 = scmp.eq.s32.totalorder %s17, 0
    %p183 = por %p181, %p182
    %p184 = scmp.ne.s32.totalorder %s170, %s171
    %p185 = scmp.eq.s32.totalorder %s18, 1
    %p186 = por %p184, %p185
    %p188 = scmp.ne.s32.totalorder %s171, %s187
    %p189 = scmp.eq.s32.totalorder %s18, 0
    %p190 = por %p188, %p189
    %p191 = scmp.le.s32.totalorder 1, %s12
    %p192 = scmp.lt.s32.totalorder %s12, 3
    %p193 = pnand %p191, %p192
    %p194 = pneg %p193
    // Predicated region
    $region9: #{run.1} parent=5 // pred_check
      _
    $region10: #{run.1} parent=5 // pred_check_branch
      %196 = sbr.rel (%p193) target = $region12
    $region11: #{run.1} parent=5 // pred_region
      %s197 = ssub.s32 %s12, 1
      // Predicated region
      $region13: #{run.1} parent=11 // pred_check
        %p198 = pneg %p71
      $region14: #{run.1} parent=11 // pred_check_branch
        %200 = sbr.rel (%p198) target = $region16
      $region15: #{run.1} parent=11 // pred_region
        _
      $region16: #{run.1} parent=11 // pred_fallthru
        _
      // Predicated region
      $region17: #{run.1} parent=11 // pred_check
        %p201 = pneg %p92
      $region18: #{run.1} parent=11 // pred_check_branch
        %203 = sbr.rel (%p201) target = $region20
      $region19: #{run.1} parent=11 // pred_region
        _
      $region20: #{run.1} parent=11 // pred_fallthru
        _
      // Predicated region
      $region21: #{run.1} parent=11 // pred_check
        %p204 = pneg %p113
      $region22: #{run.1} parent=11 // pred_check_branch
        %206 = sbr.rel (%p204) target = $region24
      $region23: #{run.1} parent=11 // pred_region
        _
      $region24: #{run.1} parent=11 // pred_fallthru
        _
      // Predicated region
      $region25: #{run.1} parent=11 // pred_check
        %p207 = pneg %p134
      $region26: #{run.1} parent=11 // pred_check_branch
        %209 = sbr.rel (%p207) target = $region28
      $region27: #{run.1} parent=11 // pred_region
        _
      $region28: #{run.1} parent=11 // pred_fallthru
        _
      // Predicated region
      $region29: #{run.1} parent=11 // pred_check
        %p210 = pneg %p155
      $region30: #{run.1} parent=11 // pred_check_branch
        %212 = sbr.rel (%p210) target = $region32
      $region31: #{run.1} parent=11 // pred_region
        _
      $region32: #{run.1} parent=11 // pred_fallthru
        _
    $region12: #{run.1} parent=5 // pred_fallthru
      _
    %p213 = scmp.lt.s32.totalorder %s12, 2
    // Predicated region
    $region33: #{run.1} parent=5 // pred_check
      %p214 = pneg %p213
    $region34: #{run.1} parent=5 // pred_check_branch
      %216 = sbr.rel (%p214) target = $region36
    $region35: #{run.1} parent=5 // pred_region
      // Predicated region
      $region37: #{run.1} parent=35 // pred_check
        %p217 = pneg %p44
      $region38: #{run.1} parent=35 // pred_check_branch
        %219 = sbr.rel (%p217) target = $region40
      $region39: #{run.1} parent=35 // pred_region
        %p220 = scmp.lt.s32.totalorder %s19, 1
        %s221 = scalar_select %p220, %s19, 1
        %s222 = smul.addr %s221, 36
        %s223 = smul.addr %s222, 4
        %s224 = scalar_lea.vmem %s0, %s223
      $region40: #{run.1} parent=35 // pred_fallthru
        _
    $region36: #{run.1} parent=5 // pred_fallthru
      _
    %p225 = scmp.le.s32.totalorder 1, %s12
    %p226 = scmp.lt.s32.totalorder %s12, 3
    %p227 = pnand %p225, %p226
    %p228 = pneg %p227
    // Predicated region
    $region41: #{run.1} parent=5 // pred_check
      _
    $region42: #{run.1} parent=5 // pred_check_branch
      %230 = sbr.rel (%p227) target = $region44
    $region43: #{run.1} parent=5 // pred_region
      %s231 = ssub.s32 %s12, 1
      %p232 = scmp.lt.s32.totalorder %s21, 1
      %s233 = scalar_select %p232, %s21, 1
      %s234 = smul.addr %s233, 36
      %s235 = smul.addr %s234, 4
      %s236 = scalar_lea.vmem %s0, %s235
      %p237 = pneg %p50
      %p238 = pneg %p47
      %p239 = pneg %p71
      %p240 = pneg %p68
      %p241 = pneg %p92
      %p242 = pneg %p89
      %p243 = pneg %p113
      %p244 = pneg %p110
      %p245 = pneg %p134
      %p246 = pneg %p131
      %p247 = pneg %p155
      %p248 = pneg %p152
      %p249 = pneg %p183
      %p250 = pneg %p180
      %s251 = smul.u32 2, %s22
      %p252 = scmp.lt.s32.totalorder %s21, 1
      %s253 = scalar_select %p252, %s21, 1
      %p254 = scmp.lt.s32.totalorder %s251, 1
      %s255 = scalar_select %p254, %s251, 1
      %s256 = smul.addr %s253, 2
      %s257 = sadd.s32 %s255, %s256
      %s258 = smul.addr %s257, 8
      %s259 = scalar_lea.vmem %s6, %s258
      %p260 = scmp.lt.s32.totalorder %s21, 1
      %s261 = scalar_select %p260, %s21, 1
      %s262 = smul.addr %s261, 36
      %s263 = smul.addr %s262, 4
      %s264 = scalar_lea.vmem %s0, %s263
      %s265 = smul.u32 2, %s22
      %p266 = scmp.lt.s32.totalorder %s21, 1
      %s267 = scalar_select %p266, %s21, 1
      %p268 = scmp.lt.s32.totalorder %s265, 1
      %s269 = scalar_select %p268, %s265, 1
      %s270 = smul.addr %s267, 2
      %s271 = sadd.s32 %s269, %s270
      %s272 = smul.addr %s271, 8
      %s273 = scalar_lea.vmem %s6, %s272
      %s274 = smul.u32 2, %s22
      %s276 = smul.u32 %s22, 16
      %s277 = smul.u32 %s276, 2
      %s278 = smul.addr %s277, 4
      %s279 = scalar_lea.vmem %s264, %s278
      %v280 = vld [vmem:[%s279] sm:$0xf]
      %v281 = vld [vmem:[%s279 + $0x4] sm:$0xf]
      %v282 = vld [vmem:[%s279 + $0x8] sm:$0xf]
      %v283 = vld [vmem:[%s279 + $0xc] sm:$0xf]
      %v284 = vld [vmem:[%s279 + $0x10] sm:$0xf]
      %v285 = vld [vmem:[%s279 + $0x14] sm:$0xf]
      %v286 = vld [vmem:[%s279 + $0x18] sm:$0xf]
      %v287 = vld [vmem:[%s279 + $0x1c] sm:$0xf]
      %v288 = vld [vmem:[%s279 + $0x20] sm:$0xf]
      %v289 = vld [vmem:[%s279 + $0x24] sm:$0xf]
      %v290 = vld [vmem:[%s279 + $0x28] sm:$0xf]
      %v291 = vld [vmem:[%s279 + $0x2c] sm:$0xf]
      %v292 = vld [vmem:[%s279 + $0x30] sm:$0xf]
      %v293 = vld [vmem:[%s279 + $0x34] sm:$0xf]
      %v294 = vld [vmem:[%s279 + $0x38] sm:$0xf]
      %v295 = vld [vmem:[%s279 + $0x3c] sm:$0xf]
      %v296 = vld [vmem:[%s279 + $0x40] sm:$0xf]
      %v297 = vld [vmem:[%s279 + $0x44] sm:$0xf]
      %v298 = vld [vmem:[%s279 + $0x48] sm:$0xf]
      %v299 = vld [vmem:[%s279 + $0x4c] sm:$0xf]
      %v300 = vld [vmem:[%s279 + $0x50] sm:$0xf]
      %v301 = vld [vmem:[%s279 + $0x54] sm:$0xf]
      %v302 = vld [vmem:[%s279 + $0x58] sm:$0xf]
      %v303 = vld [vmem:[%s279 + $0x5c] sm:$0xf]
      %v304 = vld [vmem:[%s279 + $0x60] sm:$0xf]
      %v305 = vld [vmem:[%s279 + $0x64] sm:$0xf]
      %v306 = vld [vmem:[%s279 + $0x68] sm:$0xf]
      %v307 = vld [vmem:[%s279 + $0x6c] sm:$0xf]
      %v308 = vld [vmem:[%s279 + $0x70] sm:$0xf]
      %v309 = vld [vmem:[%s279 + $0x74] sm:$0xf]
      %v310 = vld [vmem:[%s279 + $0x78] sm:$0xf]
      %v311 = vld [vmem:[%s279 + $0x7c] sm:$0xf]
      %v312 = vld [vmem:[%s1] sm:$0xf]
      %v313 = vld [vmem:[%s1 + $0x8] sm:$0xf]
      %v314 = vld [vmem:[%s1 + $0x10] sm:$0xf]
      %v315 = vld [vmem:[%s1 + $0x18] sm:$0xf]
      %v316 = vld [vmem:[%s1 + $0x20] sm:$0xf]
      %v317 = vld [vmem:[%s1 + $0x28] sm:$0xf]
      %v318 = vld [vmem:[%s1 + $0x30] sm:$0xf]
      %v319 = vld [vmem:[%s1 + $0x38] sm:$0xf]
      %v320 = vld [vmem:[%s1 + $0x40] sm:$0xf]
      %v321 = vld [vmem:[%s1 + $0x48] sm:$0xf]
      %v322 = vld [vmem:[%s1 + $0x50] sm:$0xf]
      %v323 = vld [vmem:[%s1 + $0x58] sm:$0xf]
      %s324 = sadd.s32 %s276, 1
      %s325 = smul.u32 %s324, 2
      %s326 = smul.addr %s325, 4
      %s327 = scalar_lea.vmem %s264, %s326
      %v328 = vld [vmem:[%s327] sm:$0xf]
      %v329 = vld [vmem:[%s327 + $0x4] sm:$0xf]
      %v330 = vld [vmem:[%s327 + $0x8] sm:$0xf]
      %v331 = vld [vmem:[%s327 + $0xc] sm:$0xf]
      %v332 = vld [vmem:[%s327 + $0x10] sm:$0xf]
      %v333 = vld [vmem:[%s327 + $0x14] sm:$0xf]
      %v334 = vld [vmem:[%s327 + $0x18] sm:$0xf]
      %v335 = vld [vmem:[%s327 + $0x1c] sm:$0xf]
      %v336 = vld [vmem:[%s327 + $0x20] sm:$0xf]
      %v337 = vld [vmem:[%s327 + $0x24] sm:$0xf]
      %v338 = vld [vmem:[%s327 + $0x28] sm:$0xf]
      %v339 = vld [vmem:[%s327 + $0x2c] sm:$0xf]
      %v340 = vld [vmem:[%s327 + $0x30] sm:$0xf]
      %v341 = vld [vmem:[%s327 + $0x34] sm:$0xf]
      %v342 = vld [vmem:[%s327 + $0x38] sm:$0xf]
      %v343 = vld [vmem:[%s327 + $0x3c] sm:$0xf]
      %v344 = vld [vmem:[%s327 + $0x40] sm:$0xf]
      %v345 = vld [vmem:[%s327 + $0x44] sm:$0xf]
      %v346 = vld [vmem:[%s327 + $0x48] sm:$0xf]
      %v347 = vld [vmem:[%s327 + $0x4c] sm:$0xf]
      %v348 = vld [vmem:[%s327 + $0x50] sm:$0xf]
      %v349 = vld [vmem:[%s327 + $0x54] sm:$0xf]
      %v350 = vld [vmem:[%s327 + $0x58] sm:$0xf]
      %v351 = vld [vmem:[%s327 + $0x5c] sm:$0xf]
      %v352 = vld [vmem:[%s327 + $0x60] sm:$0xf]
      %v353 = vld [vmem:[%s327 + $0x64] sm:$0xf]
      %v354 = vld [vmem:[%s327 + $0x68] sm:$0xf]
      %v355 = vld [vmem:[%s327 + $0x6c] sm:$0xf]
      %v356 = vld [vmem:[%s327 + $0x70] sm:$0xf]
      %v357 = vld [vmem:[%s327 + $0x74] sm:$0xf]
      %v358 = vld [vmem:[%s327 + $0x78] sm:$0xf]
      %v359 = vld [vmem:[%s327 + $0x7c] sm:$0xf]
      %s360 = scalar_lea.vmem %s1, 96
      %v361 = vld [vmem:[%s360] sm:$0xf]
      %v362 = vld [vmem:[%s360 + $0x8] sm:$0xf]
      %v363 = vld [vmem:[%s360 + $0x10] sm:$0xf]
      %v364 = vld [vmem:[%s360 + $0x18] sm:$0xf]
      %v365 = vld [vmem:[%s360 + $0x20] sm:$0xf]
      %v366 = vld [vmem:[%s360 + $0x28] sm:$0xf]
      %v367 = vld [vmem:[%s360 + $0x30] sm:$0xf]
      %v368 = vld [vmem:[%s360 + $0x38] sm:$0xf]
      %v369 = vld [vmem:[%s360 + $0x40] sm:$0xf]
      %v370 = vld [vmem:[%s360 + $0x48] sm:$0xf]
      %v371 = vld [vmem:[%s360 + $0x50] sm:$0xf]
      %v372 = vld [vmem:[%s360 + $0x58] sm:$0xf]
      %v405 = vunpack.c.l.b16 %v328
      %v406 = vunpack.c.l.b16 %v329
      %v407 = vunpack.c.l.b16 %v330
      %v408 = vunpack.c.l.b16 %v331
      %v409 = vunpack.c.l.b16 %v332
      %v410 = vunpack.c.l.b16 %v333
      %v411 = vunpack.c.l.b16 %v334
      %v412 = vunpack.c.l.b16 %v335
      %v413 = vunpack.c.l.b16 %v336
      %v414 = vunpack.c.l.b16 %v337
      %v415 = vunpack.c.l.b16 %v338
      %v416 = vunpack.c.l.b16 %v339
      %v417 = vunpack.c.l.b16 %v340
      %v418 = vunpack.c.l.b16 %v341
      %v419 = vunpack.c.l.b16 %v342
      %v420 = vunpack.c.l.b16 %v343
      %v421 = vunpack.c.l.b16 %v344
      %v422 = vunpack.c.l.b16 %v345
      %v423 = vunpack.c.l.b16 %v346
      %v424 = vunpack.c.l.b16 %v347
      %v425 = vunpack.c.l.b16 %v348
      %v426 = vunpack.c.l.b16 %v349
      %v427 = vunpack.c.l.b16 %v350
      %v428 = vunpack.c.l.b16 %v351
      %v429 = vunpack.c.l.b16 %v352
      %v430 = vunpack.c.l.b16 %v353
      %v431 = vunpack.c.l.b16 %v354
      %v432 = vunpack.c.l.b16 %v355
      %v433 = vunpack.c.l.b16 %v356
      %v434 = vunpack.c.l.b16 %v357
      %v435 = vunpack.c.l.b16 %v358
      %v436 = vunpack.c.l.b16 %v359
      %v437 = vpack.c.b16 %v406, %v405
      %v438 = vpack.c.b16 %v408, %v407
      %v439 = vpack.c.b16 %v410, %v409
      %v440 = vpack.c.b16 %v412, %v411
      %v441 = vpack.c.b16 %v414, %v413
      %v442 = vpack.c.b16 %v416, %v415
      %v443 = vpack.c.b16 %v418, %v417
      %v444 = vpack.c.b16 %v420, %v419
      %v445 = vpack.c.b16 %v422, %v421
      %v446 = vpack.c.b16 %v424, %v423
      %v447 = vpack.c.b16 %v426, %v425
      %v448 = vpack.c.b16 %v428, %v427
      %v449 = vpack.c.b16 %v430, %v429
      %v450 = vpack.c.b16 %v432, %v431
      %v451 = vpack.c.b16 %v434, %v433
      %v452 = vpack.c.b16 %v436, %v435
      %v465 = vunpack.c.l.b16 %v361
      %v466 = vunpack.c.l.b16 %v362
      %v467 = vunpack.c.l.b16 %v363
      %v468 = vunpack.c.l.b16 %v364
      %v469 = vunpack.c.l.b16 %v365
      %v470 = vunpack.c.l.b16 %v366
      %v471 = vunpack.c.l.b16 %v367
      %v472 = vunpack.c.l.b16 %v368
      %v473 = vunpack.c.l.b16 %v369
      %v474 = vunpack.c.l.b16 %v370
      %v475 = vunpack.c.l.b16 %v371
      %v476 = vunpack.c.l.b16 %v372
      %v477 = vpack.c.b16 %v466, %v465
      %v478 = vpack.c.b16 %v468, %v467
      %v479 = vpack.c.b16 %v470, %v469
      %v480 = vpack.c.b16 %v472, %v471
      %v481 = vpack.c.b16 %v474, %v473
      %v482 = vpack.c.b16 %v476, %v475
      %vm489 = vcmask 785408
      %v491 = vsel %vm489, %v437, 0
      %v494 = vsel %vm489, %v438, 0
      %v497 = vsel %vm489, %v439, 0
      %v500 = vsel %vm489, %v440, 0
      %v503 = vsel %vm489, %v441, 0
      %v506 = vsel %vm489, %v442, 0
      %v509 = vsel %vm489, %v443, 0
      %v512 = vsel %vm489, %v444, 0
      %v515 = vsel %vm489, %v445, 0
      %v518 = vsel %vm489, %v446, 0
      %v521 = vsel %vm489, %v447, 0
      %v524 = vsel %vm489, %v448, 0
      %v527 = vsel %vm489, %v449, 0
      %v530 = vsel %vm489, %v450, 0
      %v533 = vsel %vm489, %v451, 0
      %v536 = vsel %vm489, %v452, 0
      %538 = vmatprep.subr.bf16.mxu0 0
      %539 = vmatpush1.bf16.msra.mxu0 %v477
      %540 = vmatprep.subr.bf16.mxu0 0
      %541 = vmatpush1.bf16.msra.mxu0 %v478
      %542 = vmatprep.subr.bf16.mxu0 0
      %543 = vmatpush1.bf16.msra.mxu0 %v479
      %544 = vmatprep.subr.bf16.mxu0 0
      %545 = vmatpush1.bf16.msra.mxu0 %v480
      %546 = vmatprep.subr.bf16.mxu0 0
      %547 = vmatpush1.bf16.msra.mxu0 %v481
      %548 = vmatprep.subr.bf16.mxu0 0
      %549 = vmatpush1.bf16.msra.mxu0 %v482
      %550 = vmatprep.subr.bf16.mxu0 0
      %551 = vmatpush1.bf16.msra.mxu0 0
      %552 = vmatprep.subr.bf16.mxu0 0
      %553 = vmatpush1.bf16.msra.mxu0 0
      %554 = vmatprep.subr.bf16.mxu0 0
      %555 = vmatpush1.bf16.msra.mxu0 0
      %556 = vmatprep.subr.bf16.mxu0 0
      %557 = vmatpush1.bf16.msra.mxu0 0
      %558 = vmatprep.subr.bf16.mxu0 0
      %559 = vmatpush1.bf16.msra.mxu0 0
      %560 = vmatprep.subr.bf16.mxu0 0
      %561 = vmatpush1.bf16.msra.mxu0 0
      %562 = vmatprep.subr.bf16.mxu0 0
      %563 = vmatpush1.bf16.msra.mxu0 0
      %564 = vmatprep.subr.bf16.mxu0 0
      %565 = vmatpush1.bf16.msra.mxu0 0
      %566 = vmatprep.subr.bf16.mxu0 0
      %567 = vmatpush1.bf16.msra.mxu0 0
      %568 = vmatprep.subr.bf16.mxu0 0
      %569 = vmatpush1.bf16.msra.mxu0 0
      %570 = vmatprep.mubr.bf16.mxu0 0
      %571 = vmatmul.mubr.bf16.gmra.mrb[0].mxu0 %v491
      %v572 = vpop.f32.mrb[0].mxu0
      %v573 = vadd.f32 0.0, %v572
      %v574 = vpop.f32.mrb[0].mxu0
      %v575 = vpop.f32.mrb[0].mxu0
      %v576 = vadd.f32 0.0, %v575
      %v577 = vpop.f32.mrb[0].mxu0
      %578 = vmatprep.mubr.bf16.mxu0 0
      %579 = vmatmul.mubr.bf16.gmra.mrb[0].mxu0 %v494
      %v580 = vpop.f32.mrb[0].mxu0
      %v581 = vadd.f32 0.0, %v580
      %v582 = vpop.f32.mrb[0].mxu0
      %v583 = vpop.f32.mrb[0].mxu0
      %v584 = vadd.f32 0.0, %v583
      %v585 = vpop.f32.mrb[0].mxu0
      %586 = vmatprep.mubr.bf16.mxu0 0
      %587 = vmatmul.mubr.bf16.gmra.mrb[0].mxu0 %v497
      %v588 = vpop.f32.mrb[0].mxu0
      %v589 = vadd.f32 0.0, %v588
      %v590 = vpop.f32.mrb[0].mxu0
      %v591 = vpop.f32.mrb[0].mxu0
      %v592 = vadd.f32 0.0, %v591
      %v593 = vpop.f32.mrb[0].mxu0
      %594 = vmatprep.mubr.bf16.mxu0 0
      %595 = vmatmul.mubr.bf16.gmra.mrb[0].mxu0 %v500
      %v596 = vpop.f32.mrb[0].mxu0
      %v597 = vadd.f32 0.0, %v596
      %v598 = vpop.f32.mrb[0].mxu0
      %v599 = vpop.f32.mrb[0].mxu0
      %v600 = vadd.f32 0.0, %v599
      %v601 = vpop.f32.mrb[0].mxu0
      %602 = vmatprep.mubr.bf16.mxu0 0
      %603 = vmatmul.mubr.bf16.gmra.mrb[0].mxu0 %v503
      %v604 = vpop.f32.mrb[0].mxu0
      %v605 = vadd.f32 0.0, %v604
      %v606 = vpop.f32.mrb[0].mxu0
      %v607 = vpop.f32.mrb[0].mxu0
      %v608 = vadd.f32 0.0, %v607
      %v609 = vpop.f32.mrb[0].mxu0
      %610 = vmatprep.mubr.bf16.mxu0 0
      %611 = vmatmul.mubr.bf16.gmra.mrb[0].mxu0 %v506
      %v612 = vpop.f32.mrb[0].mxu0
      %v613 = vadd.f32 0.0, %v612
      %v614 = vpop.f32.mrb[0].mxu0
      %v615 = vpop.f32.mrb[0].mxu0
      %v616 = vadd.f32 0.0, %v615
      %v617 = vpop.f32.mrb[0].mxu0
      %618 = vmatprep.mubr.bf16.mxu0 0
      %619 = vmatmul.mubr.bf16.gmra.mrb[0].mxu0 %v509
      %v620 = vpop.f32.mrb[0].mxu0
      %v621 = vadd.f32 0.0, %v620
      %v622 = vpop.f32.mrb[0].mxu0
      %v623 = vpop.f32.mrb[0].mxu0
      %v624 = vadd.f32 0.0, %v623
      %v625 = vpop.f32.mrb[0].mxu0
      %626 = vmatprep.mubr.bf16.mxu0 0
      %627 = vmatmul.mubr.bf16.gmra.mrb[0].mxu0 %v512
      %v628 = vpop.f32.mrb[0].mxu0
      %v629 = vadd.f32 0.0, %v628
      %v630 = vpop.f32.mrb[0].mxu0
      %v631 = vpop.f32.mrb[0].mxu0
      %v632 = vadd.f32 0.0, %v631
      %v633 = vpop.f32.mrb[0].mxu0
      %634 = vmatprep.mubr.bf16.mxu0 0
      %635 = vmatmul.mubr.bf16.gmra.mrb[0].mxu0 %v515
      %v636 = vpop.f32.mrb[0].mxu0
      %v637 = vadd.f32 0.0, %v636
      %v638 = vpop.f32.mrb[0].mxu0
      %v639 = vpop.f32.mrb[0].mxu0
      %v640 = vadd.f32 0.0, %v639
      %v641 = vpop.f32.mrb[0].mxu0
      %642 = vmatprep.mubr.bf16.mxu0 0
      %643 = vmatmul.mubr.bf16.gmra.mrb[0].mxu0 %v518
      %v644 = vpop.f32.mrb[0].mxu0
      %v645 = vadd.f32 0.0, %v644
      %v646 = vpop.f32.mrb[0].mxu0
      %v647 = vpop.f32.mrb[0].mxu0
      %v648 = vadd.f32 0.0, %v647
      %v649 = vpop.f32.mrb[0].mxu0
      %650 = vmatprep.mubr.bf16.mxu0 0
      %651 = vmatmul.mubr.bf16.gmra.mrb[0].mxu0 %v521
      %v652 = vpop.f32.mrb[0].mxu0
      %v653 = vadd.f32 0.0, %v652
      %v654 = vpop.f32.mrb[0].mxu0
      %v655 = vpop.f32.mrb[0].mxu0
      %v656 = vadd.f32 0.0, %v655
      %v657 = vpop.f32.mrb[0].mxu0
      %658 = vmatprep.mubr.bf16.mxu0 0
      %659 = vmatmul.mubr.bf16.gmra.mrb[0].mxu0 %v524
      %v660 = vpop.f32.mrb[0].mxu0
      %v661 = vadd.f32 0.0, %v660
      %v662 = vpop.f32.mrb[0].mxu0
      %v663 = vpop.f32.mrb[0].mxu0
      %v664 = vadd.f32 0.0, %v663
      %v665 = vpop.f32.mrb[0].mxu0
      %666 = vmatprep.mubr.bf16.mxu0 0
      %667 = vmatmul.mubr.bf16.gmra.mrb[0].mxu0 %v527
      %v668 = vpop.f32.mrb[0].mxu0
      %v669 = vadd.f32 0.0, %v668
      %v670 = vpop.f32.mrb[0].mxu0
      %v671 = vpop.f32.mrb[0].mxu0
      %v672 = vadd.f32 0.0, %v671
      %v673 = vpop.f32.mrb[0].mxu0
      %674 = vmatprep.mubr.bf16.mxu0 0
      %675 = vmatmul.mubr.bf16.gmra.mrb[0].mxu0 %v530
      %v676 = vpop.f32.mrb[0].mxu0
      %v677 = vadd.f32 0.0, %v676
      %v678 = vpop.f32.mrb[0].mxu0
      %v679 = vpop.f32.mrb[0].mxu0
      %v680 = vadd.f32 0.0, %v679
      %v681 = vpop.f32.mrb[0].mxu0
      %682 = vmatprep.mubr.bf16.mxu0 0
      %683 = vmatmul.mubr.bf16.gmra.mrb[0].mxu0 %v533
      %v684 = vpop.f32.mrb[0].mxu0
      %v685 = vadd.f32 0.0, %v684
      %v686 = vpop.f32.mrb[0].mxu0
      %v687 = vpop.f32.mrb[0].mxu0
      %v688 = vadd.f32 0.0, %v687
      %v689 = vpop.f32.mrb[0].mxu0
      %690 = vmatprep.mubr.bf16.mxu0 0
      %691 = vmatmul.mubr.bf16.gmra.mrb[0].mxu0 %v536
      %v692 = vpop.f32.mrb[0].mxu0
      %v693 = vadd.f32 0.0, %v692
      %v694 = vpop.f32.mrb[0].mxu0
      %v695 = vpop.f32.mrb[0].mxu0
      %v696 = vadd.f32 0.0, %v695
      %v697 = vpop.f32.mrb[0].mxu0
      %698 = vdwg.mxu0
      %v731 = vunpack.c.l.b16 %v280
      %v732 = vunpack.c.l.b16 %v281
      %v733 = vunpack.c.l.b16 %v282
      %v734 = vunpack.c.l.b16 %v283
      %v735 = vunpack.c.l.b16 %v284
      %v736 = vunpack.c.l.b16 %v285
      %v737 = vunpack.c.l.b16 %v286
      %v738 = vunpack.c.l.b16 %v287
      %v739 = vunpack.c.l.b16 %v288
      %v740 = vunpack.c.l.b16 %v289
      %v741 = vunpack.c.l.b16 %v290
      %v742 = vunpack.c.l.b16 %v291
      %v743 = vunpack.c.l.b16 %v292
      %v744 = vunpack.c.l.b16 %v293
      %v745 = vunpack.c.l.b16 %v294
      %v746 = vunpack.c.l.b16 %v295
      %v747 = vunpack.c.l.b16 %v296
      %v748 = vunpack.c.l.b16 %v297
      %v749 = vunpack.c.l.b16 %v298
      %v750 = vunpack.c.l.b16 %v299
      %v751 = vunpack.c.l.b16 %v300
      %v752 = vunpack.c.l.b16 %v301
      %v753 = vunpack.c.l.b16 %v302
      %v754 = vunpack.c.l.b16 %v303
      %v755 = vunpack.c.l.b16 %v304
      %v756 = vunpack.c.l.b16 %v305
      %v757 = vunpack.c.l.b16 %v306
      %v758 = vunpack.c.l.b16 %v307
      %v759 = vunpack.c.l.b16 %v308
      %v760 = vunpack.c.l.b16 %v309
      %v761 = vunpack.c.l.b16 %v310
      %v762 = vunpack.c.l.b16 %v311
      %v763 = vpack.c.b16 %v732, %v731
      %v764 = vpack.c.b16 %v734, %v733
      %v765 = vpack.c.b16 %v736, %v735
      %v766 = vpack.c.b16 %v738, %v737
      %v767 = vpack.c.b16 %v740, %v739
      %v768 = vpack.c.b16 %v742, %v741
      %v769 = vpack.c.b16 %v744, %v743
      %v770 = vpack.c.b16 %v746, %v745
      %v771 = vpack.c.b16 %v748, %v747
      %v772 = vpack.c.b16 %v750, %v749
      %v773 = vpack.c.b16 %v752, %v751
      %v774 = vpack.c.b16 %v754, %v753
      %v775 = vpack.c.b16 %v756, %v755
      %v776 = vpack.c.b16 %v758, %v757
      %v777 = vpack.c.b16 %v760, %v759
      %v778 = vpack.c.b16 %v762, %v761
      %v791 = vunpack.c.l.b16 %v312
      %v792 = vunpack.c.l.b16 %v313
      %v793 = vunpack.c.l.b16 %v314
      %v794 = vunpack.c.l.b16 %v315
      %v795 = vunpack.c.l.b16 %v316
      %v796 = vunpack.c.l.b16 %v317
      %v797 = vunpack.c.l.b16 %v318
      %v798 = vunpack.c.l.b16 %v319
      %v799 = vunpack.c.l.b16 %v320
      %v800 = vunpack.c.l.b16 %v321
      %v801 = vunpack.c.l.b16 %v322
      %v802 = vunpack.c.l.b16 %v323
      %v803 = vpack.c.b16 %v792, %v791
      %v804 = vpack.c.b16 %v794, %v793
      %v805 = vpack.c.b16 %v796, %v795
      %v806 = vpack.c.b16 %v798, %v797
      %v807 = vpack.c.b16 %v800, %v799
      %v808 = vpack.c.b16 %v802, %v801
      %v816 = vsel %vm489, %v763, 0
      %v819 = vsel %vm489, %v764, 0
      %v822 = vsel %vm489, %v765, 0
      %v825 = vsel %vm489, %v766, 0
      %v828 = vsel %vm489, %v767, 0
      %v831 = vsel %vm489, %v768, 0
      %v834 = vsel %vm489, %v769, 0
      %v837 = vsel %vm489, %v770, 0
      %v840 = vsel %vm489, %v771, 0
      %v843 = vsel %vm489, %v772, 0
      %v846 = vsel %vm489, %v773, 0
      %v849 = vsel %vm489, %v774, 0
      %v852 = vsel %vm489, %v775, 0
      %v855 = vsel %vm489, %v776, 0
      %v858 = vsel %vm489, %v777, 0
      %v861 = vsel %vm489, %v778, 0
      %863 = vmatprep.subr.bf16.mxu0 0
      %864 = vmatpush1.bf16.msra.mxu0 %v803
      %865 = vmatprep.subr.bf16.mxu0 0
      %866 = vmatpush1.bf16.msra.mxu0 %v804
      %867 = vmatprep.subr.bf16.mxu0 0
      %868 = vmatpush1.bf16.msra.mxu0 %v805
      %869 = vmatprep.subr.bf16.mxu0 0
      %870 = vmatpush1.bf16.msra.mxu0 %v806
      %871 = vmatprep.subr.bf16.mxu0 0
      %872 = vmatpush1.bf16.msra.mxu0 %v807
      %873 = vmatprep.subr.bf16.mxu0 0
      %874 = vmatpush1.bf16.msra.mxu0 %v808
      %875 = vmatprep.subr.bf16.mxu0 0
      %876 = vmatpush1.bf16.msra.mxu0 0
      %877 = vmatprep.subr.bf16.mxu0 0
      %878 = vmatpush1.bf16.msra.mxu0 0
      %879 = vmatprep.subr.bf16.mxu0 0
      %880 = vmatpush1.bf16.msra.mxu0 0
      %881 = vmatprep.subr.bf16.mxu0 0
      %882 = vmatpush1.bf16.msra.mxu0 0
      %883 = vmatprep.subr.bf16.mxu0 0
      %884 = vmatpush1.bf16.msra.mxu0 0
      %885 = vmatprep.subr.bf16.mxu0 0
      %886 = vmatpush1.bf16.msra.mxu0 0
      %887 = vmatprep.subr.bf16.mxu0 0
      %888 = vmatpush1.bf16.msra.mxu0 0
      %889 = vmatprep.subr.bf16.mxu0 0
      %890 = vmatpush1.bf16.msra.mxu0 0
      %891 = vmatprep.subr.bf16.mxu0 0
      %892 = vmatpush1.bf16.msra.mxu0 0
      %893 = vmatprep.subr.bf16.mxu0 0
      %894 = vmatpush1.bf16.msra.mxu0 0
      %895 = vmatprep.mubr.bf16.mxu0 0
      %896 = vmatmul.mubr.bf16.gmra.mrb[0].mxu0 %v816
      %v897 = vpop.f32.mrb[0].mxu0
      %v898 = vadd.f32 %v573, %v897
      %v899 = vpop.f32.mrb[0].mxu0
      %v900 = vpop.f32.mrb[0].mxu0
      %v901 = vadd.f32 %v576, %v900
      %v902 = vpop.f32.mrb[0].mxu0
      %903 = vmatprep.mubr.bf16.mxu0 0
      %904 = vmatmul.mubr.bf16.gmra.mrb[0].mxu0 %v819
      %v905 = vpop.f32.mrb[0].mxu0
      %v906 = vadd.f32 %v581, %v905
      %v907 = vpop.f32.mrb[0].mxu0
      %v908 = vpop.f32.mrb[0].mxu0
      %v909 = vadd.f32 %v584, %v908
      %v910 = vpop.f32.mrb[0].mxu0
      %911 = vmatprep.mubr.bf16.mxu0 0
      %912 = vmatmul.mubr.bf16.gmra.mrb[0].mxu0 %v822
      %v913 = vpop.f32.mrb[0].mxu0
      %v914 = vadd.f32 %v589, %v913
      %v915 = vpop.f32.mrb[0].mxu0
      %v916 = vpop.f32.mrb[0].mxu0
      %v917 = vadd.f32 %v592, %v916
      %v918 = vpop.f32.mrb[0].mxu0
      %919 = vmatprep.mubr.bf16.mxu0 0
      %920 = vmatmul.mubr.bf16.gmra.mrb[0].mxu0 %v825
      %v921 = vpop.f32.mrb[0].mxu0
      %v922 = vadd.f32 %v597, %v921
      %v923 = vpop.f32.mrb[0].mxu0
      %v924 = vpop.f32.mrb[0].mxu0
      %v925 = vadd.f32 %v600, %v924
      %v926 = vpop.f32.mrb[0].mxu0
      %927 = vmatprep.mubr.bf16.mxu0 0
      %928 = vmatmul.mubr.bf16.gmra.mrb[0].mxu0 %v828
      %v929 = vpop.f32.mrb[0].mxu0
      %v930 = vadd.f32 %v605, %v929
      %v931 = vpop.f32.mrb[0].mxu0
      %v932 = vpop.f32.mrb[0].mxu0
      %v933 = vadd.f32 %v608, %v932
      %v934 = vpop.f32.mrb[0].mxu0
      %935 = vmatprep.mubr.bf16.mxu0 0
      %936 = vmatmul.mubr.bf16.gmra.mrb[0].mxu0 %v831
      %v937 = vpop.f32.mrb[0].mxu0
      %v938 = vadd.f32 %v613, %v937
      %v939 = vpop.f32.mrb[0].mxu0
      %v940 = vpop.f32.mrb[0].mxu0
      %v941 = vadd.f32 %v616, %v940
      %v942 = vpop.f32.mrb[0].mxu0
      %943 = vmatprep.mubr.bf16.mxu0 0
      %944 = vmatmul.mubr.bf16.gmra.mrb[0].mxu0 %v834
      %v945 = vpop.f32.mrb[0].mxu0
      %v946 = vadd.f32 %v621, %v945
      %v947 = vpop.f32.mrb[0].mxu0
      %v948 = vpop.f32.mrb[0].mxu0
      %v949 = vadd.f32 %v624, %v948
      %v950 = vpop.f32.mrb[0].mxu0
      %951 = vmatprep.mubr.bf16.mxu0 0
      %952 = vmatmul.mubr.bf16.gmra.mrb[0].mxu0 %v837
      %v953 = vpop.f32.mrb[0].mxu0
      %v954 = vadd.f32 %v629, %v953
      %v955 = vpop.f32.mrb[0].mxu0
      %v956 = vpop.f32.mrb[0].mxu0
      %v957 = vadd.f32 %v632, %v956
      %v958 = vpop.f32.mrb[0].mxu0
      %959 = vmatprep.mubr.bf16.mxu0 0
      %960 = vmatmul.mubr.bf16.gmra.mrb[0].mxu0 %v840
      %v961 = vpop.f32.mrb[0].mxu0
      %v962 = vadd.f32 %v637, %v961
      %v963 = vpop.f32.mrb[0].mxu0
      %v964 = vpop.f32.mrb[0].mxu0
      %v965 = vadd.f32 %v640, %v964
      %v966 = vpop.f32.mrb[0].mxu0
      %967 = vmatprep.mubr.bf16.mxu0 0
      %968 = vmatmul.mubr.bf16.gmra.mrb[0].mxu0 %v843
      %v969 = vpop.f32.mrb[0].mxu0
      %v970 = vadd.f32 %v645, %v969
      %v971 = vpop.f32.mrb[0].mxu0
      %v972 = vpop.f32.mrb[0].mxu0
      %v973 = vadd.f32 %v648, %v972
      %v974 = vpop.f32.mrb[0].mxu0
      %975 = vmatprep.mubr.bf16.mxu0 0
      %976 = vmatmul.mubr.bf16.gmra.mrb[0].mxu0 %v846
      %v977 = vpop.f32.mrb[0].mxu0
      %v978 = vadd.f32 %v653, %v977
      %v979 = vpop.f32.mrb[0].mxu0
      %v980 = vpop.f32.mrb[0].mxu0
      %v981 = vadd.f32 %v656, %v980
      %v982 = vpop.f32.mrb[0].mxu0
      %983 = vmatprep.mubr.bf16.mxu0 0
      %984 = vmatmul.mubr.bf16.gmra.mrb[0].mxu0 %v849
      %v985 = vpop.f32.mrb[0].mxu0
      %v986 = vadd.f32 %v661, %v985
      %v987 = vpop.f32.mrb[0].mxu0
      %v988 = vpop.f32.mrb[0].mxu0
      %v989 = vadd.f32 %v664, %v988
      %v990 = vpop.f32.mrb[0].mxu0
      %991 = vmatprep.mubr.bf16.mxu0 0
      %992 = vmatmul.mubr.bf16.gmra.mrb[0].mxu0 %v852
      %v993 = vpop.f32.mrb[0].mxu0
      %v994 = vadd.f32 %v669, %v993
      %v995 = vpop.f32.mrb[0].mxu0
      %v996 = vpop.f32.mrb[0].mxu0
      %v997 = vadd.f32 %v672, %v996
      %v998 = vpop.f32.mrb[0].mxu0
      %999 = vmatprep.mubr.bf16.mxu0 0
      %1000 = vmatmul.mubr.bf16.gmra.mrb[0].mxu0 %v855
      %v1001 = vpop.f32.mrb[0].mxu0
      %v1002 = vadd.f32 %v677, %v1001
      %v1003 = vpop.f32.mrb[0].mxu0
      %v1004 = vpop.f32.mrb[0].mxu0
      %v1005 = vadd.f32 %v680, %v1004
      %v1006 = vpop.f32.mrb[0].mxu0
      %1007 = vmatprep.mubr.bf16.mxu0 0
      %1008 = vmatmul.mubr.bf16.gmra.mrb[0].mxu0 %v858
      %v1009 = vpop.f32.mrb[0].mxu0
      %v1010 = vadd.f32 %v685, %v1009
      %v1011 = vpop.f32.mrb[0].mxu0
      %v1012 = vpop.f32.mrb[0].mxu0
      %v1013 = vadd.f32 %v688, %v1012
      %v1014 = vpop.f32.mrb[0].mxu0
      %1015 = vmatprep.mubr.bf16.mxu0 0
      %1016 = vmatmul.mubr.bf16.gmra.mrb[0].mxu0 %v861
      %v1017 = vpop.f32.mrb[0].mxu0
      %v1018 = vadd.f32 %v693, %v1017
      %v1019 = vpop.f32.mrb[0].mxu0
      %v1020 = vpop.f32.mrb[0].mxu0
      %v1021 = vadd.f32 %v696, %v1020
      %v1022 = vpop.f32.mrb[0].mxu0
      %1023 = vdwg.mxu0
      %s1024 = sadd.s32 %s276, 2
      %s1025 = smul.u32 %s1024, 2
      %s1026 = smul.addr %s1025, 4
      %s1027 = scalar_lea.vmem %s264, %s1026
      %v1028 = vld [vmem:[%s1027] sm:$0xf]
      %v1029 = vld [vmem:[%s1027 + $0x4] sm:$0xf]
      %v1030 = vld [vmem:[%s1027 + $0x8] sm:$0xf]
      %v1031 = vld [vmem:[%s1027 + $0xc] sm:$0xf]
      %v1032 = vld [vmem:[%s1027 + $0x10] sm:$0xf]
      %v1033 = vld [vmem:[%s1027 + $0x14] sm:$0xf]
      %v1034 = vld [vmem:[%s1027 + $0x18] sm:$0xf]
      %v1035 = vld [vmem:[%s1027 + $0x1c] sm:$0xf]
      %v1036 = vld [vmem:[%s1027 + $0x20] sm:$0xf]
      %v1037 = vld [vmem:[%s1027 + $0x24] sm:$0xf]
      %v1038 = vld [vmem:[%s1027 + $0x28] sm:$0xf]
      %v1039 = vld [vmem:[%s1027 + $0x2c] sm:$0xf]
      %v1040 = vld [vmem:[%s1027 + $0x30] sm:$0xf]
      %v1041 = vld [vmem:[%s1027 + $0x34] sm:$0xf]
      %v1042 = vld [vmem:[%s1027 + $0x38] sm:$0xf]
      %v1043 = vld [vmem:[%s1027 + $0x3c] sm:$0xf]
      %v1044 = vld [vmem:[%s1027 + $0x40] sm:$0xf]
      %v1045 = vld [vmem:[%s1027 + $0x44] sm:$0xf]
      %v1046 = vld [vmem:[%s1027 + $0x48] sm:$0xf]
      %v1047 = vld [vmem:[%s1027 + $0x4c] sm:$0xf]
      %v1048 = vld [vmem:[%s1027 + $0x50] sm:$0xf]
      %v1049 = vld [vmem:[%s1027 + $0x54] sm:$0xf]
      %v1050 = vld [vmem:[%s1027 + $0x58] sm:$0xf]
      %v1051 = vld [vmem:[%s1027 + $0x5c] sm:$0xf]
      %v1052 = vld [vmem:[%s1027 + $0x60] sm:$0xf]
      %v1053 = vld [vmem:[%s1027 + $0x64] sm:$0xf]
      %v1054 = vld [vmem:[%s1027 + $0x68] sm:$0xf]
      %v1055 = vld [vmem:[%s1027 + $0x6c] sm:$0xf]
      %v1056 = vld [vmem:[%s1027 + $0x70] sm:$0xf]
      %v1057 = vld [vmem:[%s1027 + $0x74] sm:$0xf]
      %v1058 = vld [vmem:[%s1027 + $0x78] sm:$0xf]
      %v1059 = vld [vmem:[%s1027 + $0x7c] sm:$0xf]
      %s1060 = scalar_lea.vmem %s1, 192
      %v1061 = vld [vmem:[%s1060] sm:$0xf]
      %v1062 = vld [vmem:[%s1060 + $0x8] sm:$0xf]
      %v1063 = vld [vmem:[%s1060 + $0x10] sm:$0xf]
      %v1064 = vld [vmem:[%s1060 + $0x18] sm:$0xf]
      %v1065 = vld [vmem:[%s1060 + $0x20] sm:$0xf]
      %v1066 = vld [vmem:[%s1060 + $0x28] sm:$0xf]
      %v1067 = vld [vmem:[%s1060 + $0x30] sm:$0xf]
      %v1068 = vld [vmem:[%s1060 + $0x38] sm:$0xf]
      %v1069 = vld [vmem:[%s1060 + $0x40] sm:$0xf]
      %v1070 = vld [vmem:[%s1060 + $0x48] sm:$0xf]
      %v1071 = vld [vmem:[%s1060 + $0x50] sm:$0xf]
      %v1072 = vld [vmem:[%s1060 + $0x58] sm:$0xf]
      %v1105 = vunpack.c.l.b16 %v1028
      %v1106 = vunpack.c.l.b16 %v1029
      %v1107 = vunpack.c.l.b16 %v1030
      %v1108 = vunpack.c.l.b16 %v1031
      %v1109 = vunpack.c.l.b16 %v1032
      %v1110 = vunpack.c.l.b16 %v1033
      %v1111 = vunpack.c.l.b16 %v1034
      %v1112 = vunpack.c.l.b16 %v1035
      %v1113 = vunpack.c.l.b16 %v1036
      %v1114 = vunpack.c.l.b16 %v1037
      %v1115 = vunpack.c.l.b16 %v1038
      %v1116 = vunpack.c.l.b16 %v1039
      %v1117 = vunpack.c.l.b16 %v1040
      %v1118 = vunpack.c.l.b16 %v1041
      %v1119 = vunpack.c.l.b16 %v1042
      %v1120 = vunpack.c.l.b16 %v1043
      %v1121 = vunpack.c.l.b16 %v1044
      %v1122 = vunpack.c.l.b16 %v1045
      %v1123 = vunpack.c.l.b16 %v1046
      %v1124 = vunpack.c.l.b16 %v1047
      %v1125 = vunpack.c.l.b16 %v1048
      %v1126 = vunpack.c.l.b16 %v1049
      %v1127 = vunpack.c.l.b16 %v1050
      %v1128 = vunpack.c.l.b16 %v1051
      %v1129 = vunpack.c.l.b16 %v1052
      %v1130 = vunpack.c.l.b16 %v1053
      %v1131 = vunpack.c.l.b16 %v1054
      %v1132 = vunpack.c.l.b16 %v1055
      %v1133 = vunpack.c.l.b16 %v1056
      %v1134 = vunpack.c.l.b16 %v1057
      %v1135 = vunpack.c.l.b16 %v1058
      %v1136 = vunpack.c.l.b16 %v1059
      %v1137 = vpack.c.b16 %v1106, %v1105
      %v1138 = vpack.c.b16 %v1108, %v1107
      %v1139 = vpack.c.b16 %v1110, %v1109
      %v1140 = vpack.c.b16 %v1112, %v1111
      %v1141 = vpack.c.b16 %v1114, %v1113
      %v1142 = vpack.c.b16 %v1116, %v1115
      %v1143 = vpack.c.b16 %v1118, %v1117
      %v1144 = vpack.c.b16 %v1120, %v1119
      %v1145 = vpack.c.b16 %v1122, %v1121
      %v1146 = vpack.c.b16 %v1124, %v1123
      %v1147 = vpack.c.b16 %v1126, %v1125
      %v1148 = vpack.c.b16 %v1128, %v1127
      %v1149 = vpack.c.b16 %v1130, %v1129
      %v1150 = vpack.c.b16 %v1132, %v1131
      %v1151 = vpack.c.b16 %v1134, %v1133
      %v1152 = vpack.c.b16 %v1136, %v1135
      %v1165 = vunpack.c.l.b16 %v1061
      %v1166 = vunpack.c.l.b16 %v1062
      %v1167 = vunpack.c.l.b16 %v1063
      %v1168 = vunpack.c.l.b16 %v1064
      %v1169 = vunpack.c.l.b16 %v1065
      %v1170 = vunpack.c.l.b16 %v1066
      %v1171 = vunpack.c.l.b16 %v1067
      %v1172 = vunpack.c.l.b16 %v1068
      %v1173 = vunpack.c.l.b16 %v1069
      %v1174 = vunpack.c.l.b16 %v1070
      %v1175 = vunpack.c.l.b16 %v1071
      %v1176 = vunpack.c.l.b16 %v1072
      %v1177 = vpack.c.b16 %v1166, %v1165
      %v1178 = vpack.c.b16 %v1168, %v1167
      %v1179 = vpack.c.b16 %v1170, %v1169
      %v1180 = vpack.c.b16 %v1172, %v1171
      %v1181 = vpack.c.b16 %v1174, %v1173
      %v1182 = vpack.c.b16 %v1176, %v1175
      %v1190 = vsel %vm489, %v1137, 0
      %v1193 = vsel %vm489, %v1138, 0
      %v1196 = vsel %vm489, %v1139, 0
      %v1199 = vsel %vm489, %v1140, 0
      %v1202 = vsel %vm489, %v1141, 0
      %v1205 = vsel %vm489, %v1142, 0
      %v1208 = vsel %vm489, %v1143, 0
      %v1211 = vsel %vm489, %v1144, 0
      %v1214 = vsel %vm489, %v1145, 0
      %v1217 = vsel %vm489, %v1146, 0
      %v1220 = vsel %vm489, %v1147, 0
      %v1223 = vsel %vm489, %v1148, 0
      %v1226 = vsel %vm489, %v1149, 0
      %v1229 = vsel %vm489, %v1150, 0
      %v1232 = vsel %vm489, %v1151, 0
      %v1235 = vsel %vm489, %v1152, 0
      %1237 = vmatprep.subr.bf16.mxu0 0
      %1238 = vmatpush1.bf16.msra.mxu0 %v1177
      %1239 = vmatprep.subr.bf16.mxu0 0
      %1240 = vmatpush1.bf16.msra.mxu0 %v1178
      %1241 = vmatprep.subr.bf16.mxu0 0
      %1242 = vmatpush1.bf16.msra.mxu0 %v1179
      %1243 = vmatprep.subr.bf16.mxu0 0
      %1244 = vmatpush1.bf16.msra.mxu0 %v1180
      %1245 = vmatprep.subr.bf16.mxu0 0
      %1246 = vmatpush1.bf16.msra.mxu0 %v1181
      %1247 = vmatprep.subr.bf16.mxu0 0
      %1248 = vmatpush1.bf16.msra.mxu0 %v1182
      %1249 = vmatprep.subr.bf16.mxu0 0
      %1250 = vmatpush1.bf16.msra.mxu0 0
      %1251 = vmatprep.subr.bf16.mxu0 0
      %1252 = vmatpush1.bf16.msra.mxu0 0
      %1253 = vmatprep.subr.bf16.mxu0 0
      %1254 = vmatpush1.bf16.msra.mxu0 0
      %1255 = vmatprep.subr.bf16.mxu0 0
      %1256 = vmatpush1.bf16.msra.mxu0 0
      %1257 = vmatprep.subr.bf16.mxu0 0
      %1258 = vmatpush1.bf16.msra.mxu0 0
      %1259 = vmatprep.subr.bf16.mxu0 0
      %1260 = vmatpush1.bf16.msra.mxu0 0
      %1261 = vmatprep.subr.bf16.mxu0 0
      %1262 = vmatpush1.bf16.msra.mxu0 0
      %1263 = vmatprep.subr.bf16.mxu0 0
      %1264 = vmatpush1.bf16.msra.mxu0 0
      %1265 = vmatprep.subr.bf16.mxu0 0
      %1266 = vmatpush1.bf16.msra.mxu0 0
      %1267 = vmatprep.subr.bf16.mxu0 0
      %1268 = vmatpush1.bf16.msra.mxu0 0
      %1269 = vmatprep.mubr.bf16.mxu0 0
      %1270 = vmatmul.mubr.bf16.gmra.mrb[0].mxu0 %v1190
      %v1271 = vpop.f32.mrb[0].mxu0
      %v1272 = vadd.f32 0.0, %v1271
      %v1273 = vpop.f32.mrb[0].mxu0
      %v1274 = vpop.f32.mrb[0].mxu0
      %v1275 = vadd.f32 0.0, %v1274
      %v1276 = vpop.f32.mrb[0].mxu0
      %1277 = vmatprep.mubr.bf16.mxu0 0
      %1278 = vmatmul.mubr.bf16.gmra.mrb[0].mxu0 %v1193
      %v1279 = vpop.f32.mrb[0].mxu0
      %v1280 = vadd.f32 0.0, %v1279
      %v1281 = vpop.f32.mrb[0].mxu0
      %v1282 = vpop.f32.mrb[0].mxu0
      %v1283 = vadd.f32 0.0, %v1282
      %v1284 = vpop.f32.mrb[0].mxu0
      %1285 = vmatprep.mubr.bf16.mxu0 0
      %1286 = vmatmul.mubr.bf16.gmra.mrb[0].mxu0 %v1196
      %v1287 = vpop.f32.mrb[0].mxu0
      %v1288 = vadd.f32 0.0, %v1287
      %v1289 = vpop.f32.mrb[0].mxu0
      %v1290 = vpop.f32.mrb[0].mxu0
      %v1291 = vadd.f32 0.0, %v1290
      %v1292 = vpop.f32.mrb[0].mxu0
      %1293 = vmatprep.mubr.bf16.mxu0 0
      %1294 = vmatmul.mubr.bf16.gmra.mrb[0].mxu0 %v1199
      %v1295 = vpop.f32.mrb[0].mxu0
      %v1296 = vadd.f32 0.0, %v1295
      %v1297 = vpop.f32.mrb[0].mxu0
      %v1298 = vpop.f32.mrb[0].mxu0
      %v1299 = vadd.f32 0.0, %v1298
      %v1300 = vpop.f32.mrb[0].mxu0
      %1301 = vmatprep.mubr.bf16.mxu0 0
      %1302 = vmatmul.mubr.bf16.gmra.mrb[0].mxu0 %v1202
      %v1303 = vpop.f32.mrb[0].mxu0
      %v1304 = vadd.f32 0.0, %v1303
      %v1305 = vpop.f32.mrb[0].mxu0
      %v1306 = vpop.f32.mrb[0].mxu0
      %v1307 = vadd.f32 0.0, %v1306
      %v1308 = vpop.f32.mrb[0].mxu0
      %1309 = vmatprep.mubr.bf16.mxu0 0
      %1310 = vmatmul.mubr.bf16.gmra.mrb[0].mxu0 %v1205
      %v1311 = vpop.f32.mrb[0].mxu0
      %v1312 = vadd.f32 0.0, %v1311
      %v1313 = vpop.f32.mrb[0].mxu0
      %v1314 = vpop.f32.mrb[0].mxu0
      %v1315 = vadd.f32 0.0, %v1314
      %v1316 = vpop.f32.mrb[0].mxu0
      %1317 = vmatprep.mubr.bf16.mxu0 0
      %1318 = vmatmul.mubr.bf16.gmra.mrb[0].mxu0 %v1208
      %v1319 = vpop.f32.mrb[0].mxu0
      %v1320 = vadd.f32 0.0, %v1319
      %v1321 = vpop.f32.mrb[0].mxu0
      %v1322 = vpop.f32.mrb[0].mxu0
      %v1323 = vadd.f32 0.0, %v1322
      %v1324 = vpop.f32.mrb[0].mxu0
      %1325 = vmatprep.mubr.bf16.mxu0 0
      %1326 = vmatmul.mubr.bf16.gmra.mrb[0].mxu0 %v1211
      %v1327 = vpop.f32.mrb[0].mxu0
      %v1328 = vadd.f32 0.0, %v1327
      %v1329 = vpop.f32.mrb[0].mxu0
      %v1330 = vpop.f32.mrb[0].mxu0
      %v1331 = vadd.f32 0.0, %v1330
      %v1332 = vpop.f32.mrb[0].mxu0
      %1333 = vmatprep.mubr.bf16.mxu0 0
      %1334 = vmatmul.mubr.bf16.gmra.mrb[0].mxu0 %v1214
      %v1335 = vpop.f32.mrb[0].mxu0
      %v1336 = vadd.f32 0.0, %v1335
      %v1337 = vpop.f32.mrb[0].mxu0
      %v1338 = vpop.f32.mrb[0].mxu0
      %v1339 = vadd.f32 0.0, %v1338
      %v1340 = vpop.f32.mrb[0].mxu0
      %1341 = vmatprep.mubr.bf16.mxu0 0
      %1342 = vmatmul.mubr.bf16.gmra.mrb[0].mxu0 %v1217
      %v1343 = vpop.f32.mrb[0].mxu0
      %v1344 = vadd.f32 0.0, %v1343
      %v1345 = vpop.f32.mrb[0].mxu0
      %v1346 = vpop.f32.mrb[0].mxu0
      %v1347 = vadd.f32 0.0, %v1346
      %v1348 = vpop.f32.mrb[0].mxu0
      %1349 = vmatprep.mubr.bf16.mxu0 0
      %1350 = vmatmul.mubr.bf16.gmra.mrb[0].mxu0 %v1220
      %v1351 = vpop.f32.mrb[0].mxu0
      %v1352 = vadd.f32 0.0, %v1351
      %v1353 = vpop.f32.mrb[0].mxu0
      %v1354 = vpop.f32.mrb[0].mxu0
      %v1355 = vadd.f32 0.0, %v1354
      %v1356 = vpop.f32.mrb[0].mxu0
      %1357 = vmatprep.mubr.bf16.mxu0 0
      %1358 = vmatmul.mubr.bf16.gmra.mrb[0].mxu0 %v1223
      %v1359 = vpop.f32.mrb[0].mxu0
      %v1360 = vadd.f32 0.0, %v1359
      %v1361 = vpop.f32.mrb[0].mxu0
      %v1362 = vpop.f32.mrb[0].mxu0
      %v1363 = vadd.f32 0.0, %v1362
      %v1364 = vpop.f32.mrb[0].mxu0
      %1365 = vmatprep.mubr.bf16.mxu0 0
      %1366 = vmatmul.mubr.bf16.gmra.mrb[0].mxu0 %v1226
      %v1367 = vpop.f32.mrb[0].mxu0
      %v1368 = vadd.f32 0.0, %v1367
      %v1369 = vpop.f32.mrb[0].mxu0
      %v1370 = vpop.f32.mrb[0].mxu0
      %v1371 = vadd.f32 0.0, %v1370
      %v1372 = vpop.f32.mrb[0].mxu0
      %1373 = vmatprep.mubr.bf16.mxu0 0
      %1374 = vmatmul.mubr.bf16.gmra.mrb[0].mxu0 %v1229
      %v1375 = vpop.f32.mrb[0].mxu0
      %v1376 = vadd.f32 0.0, %v1375
      %v1377 = vpop.f32.mrb[0].mxu0
      %v1378 = vpop.f32.mrb[0].mxu0
      %v1379 = vadd.f32 0.0, %v1378
      %v1380 = vpop.f32.mrb[0].mxu0
      %1381 = vmatprep.mubr.bf16.mxu0 0
      %1382 = vmatmul.mubr.bf16.gmra.mrb[0].mxu0 %v1232
      %v1383 = vpop.f32.mrb[0].mxu0
      %v1384 = vadd.f32 0.0, %v1383
      %v1385 = vpop.f32.mrb[0].mxu0
      %v1386 = vpop.f32.mrb[0].mxu0
      %v1387 = vadd.f32 0.0, %v1386
      %v1388 = vpop.f32.mrb[0].mxu0
      %1389 = vmatprep.mubr.bf16.mxu0 0
      %1390 = vmatmul.mubr.bf16.gmra.mrb[0].mxu0 %v1235
      %v1391 = vpop.f32.mrb[0].mxu0
      %v1392 = vadd.f32 0.0, %v1391
      %v1393 = vpop.f32.mrb[0].mxu0
      %v1394 = vpop.f32.mrb[0].mxu0
      %v1395 = vadd.f32 0.0, %v1394
      %v1396 = vpop.f32.mrb[0].mxu0
      %1397 = vdwg.mxu0
      %v1398 = vadd.f32 %v898, %v1272
      %v1399 = vadd.f32 %v901, %v1275
      %v1400 = vadd.f32 %v906, %v1280
      %v1401 = vadd.f32 %v909, %v1283
      %v1402 = vadd.f32 %v914, %v1288
      %v1403 = vadd.f32 %v917, %v1291
      %v1404 = vadd.f32 %v922, %v1296
      %v1405 = vadd.f32 %v925, %v1299
      %v1406 = vadd.f32 %v930, %v1304
      %v1407 = vadd.f32 %v933, %v1307
      %v1408 = vadd.f32 %v938, %v1312
      %v1409 = vadd.f32 %v941, %v1315
      %v1410 = vadd.f32 %v946, %v1320
      %v1411 = vadd.f32 %v949, %v1323
      %v1412 = vadd.f32 %v954, %v1328
      %v1413 = vadd.f32 %v957, %v1331
      %v1414 = vadd.f32 %v962, %v1336
      %v1415 = vadd.f32 %v965, %v1339
      %v1416 = vadd.f32 %v970, %v1344
      %v1417 = vadd.f32 %v973, %v1347
      %v1418 = vadd.f32 %v978, %v1352
      %v1419 = vadd.f32 %v981, %v1355
      %v1420 = vadd.f32 %v986, %v1360
      %v1421 = vadd.f32 %v989, %v1363
      %v1422 = vadd.f32 %v994, %v1368
      %v1423 = vadd.f32 %v997, %v1371
      %v1424 = vadd.f32 %v1002, %v1376
      %v1425 = vadd.f32 %v1005, %v1379
      %v1426 = vadd.f32 %v1010, %v1384
      %v1427 = vadd.f32 %v1013, %v1387
      %v1428 = vadd.f32 %v1018, %v1392
      %v1429 = vadd.f32 %v1021, %v1395
      %v1430 = vld [vmem:[%s2] sm:$0x1]
      %v1432 = vlaneseq
      %v1433 = vshrl.u32 %v1432, 7
      %v1434 = vsub.s32 0, %v1433
      %v1435 = vrot.slane %v1430, %v1434
      %v1437 = vmul.f32 %v1398, %v1435
      %v1438 = vmul.f32 %v1399, %v1435
      %v1439 = vmul.f32 %v1400, %v1435
      %v1440 = vmul.f32 %v1401, %v1435
      %v1441 = vmul.f32 %v1402, %v1435
      %v1442 = vmul.f32 %v1403, %v1435
      %v1443 = vmul.f32 %v1404, %v1435
      %v1444 = vmul.f32 %v1405, %v1435
      %v1445 = vmul.f32 %v1406, %v1435
      %v1446 = vmul.f32 %v1407, %v1435
      %v1447 = vmul.f32 %v1408, %v1435
      %v1448 = vmul.f32 %v1409, %v1435
      %v1449 = vmul.f32 %v1410, %v1435
      %v1450 = vmul.f32 %v1411, %v1435
      %v1451 = vmul.f32 %v1412, %v1435
      %v1452 = vmul.f32 %v1413, %v1435
      %v1453 = vmul.f32 %v1414, %v1435
      %v1454 = vmul.f32 %v1415, %v1435
      %v1455 = vmul.f32 %v1416, %v1435
      %v1456 = vmul.f32 %v1417, %v1435
      %v1457 = vmul.f32 %v1418, %v1435
      %v1458 = vmul.f32 %v1419, %v1435
      %v1459 = vmul.f32 %v1420, %v1435
      %v1460 = vmul.f32 %v1421, %v1435
      %v1461 = vmul.f32 %v1422, %v1435
      %v1462 = vmul.f32 %v1423, %v1435
      %v1463 = vmul.f32 %v1424, %v1435
      %v1464 = vmul.f32 %v1425, %v1435
      %v1465 = vmul.f32 %v1426, %v1435
      %v1466 = vmul.f32 %v1427, %v1435
      %v1467 = vmul.f32 %v1428, %v1435
      %v1468 = vmul.f32 %v1429, %v1435
      %v1469 = vld [vmem:[%s3] sm:$0x1]
      %v1471 = vlaneseq
      %v1472 = vshrl.u32 %v1471, 7
      %v1473 = vsub.s32 0, %v1472
      %v1474 = vrot.slane %v1469, %v1473
      %v1476 = vadd.f32 %v1437, %v1474
      %v1477 = vadd.f32 %v1438, %v1474
      %v1478 = vadd.f32 %v1439, %v1474
      %v1479 = vadd.f32 %v1440, %v1474
      %v1480 = vadd.f32 %v1441, %v1474
      %v1481 = vadd.f32 %v1442, %v1474
      %v1482 = vadd.f32 %v1443, %v1474
      %v1483 = vadd.f32 %v1444, %v1474
      %v1484 = vadd.f32 %v1445, %v1474
      %v1485 = vadd.f32 %v1446, %v1474
      %v1486 = vadd.f32 %v1447, %v1474
      %v1487 = vadd.f32 %v1448, %v1474
      %v1488 = vadd.f32 %v1449, %v1474
      %v1489 = vadd.f32 %v1450, %v1474
      %v1490 = vadd.f32 %v1451, %v1474
      %v1491 = vadd.f32 %v1452, %v1474
      %v1492 = vadd.f32 %v1453, %v1474
      %v1493 = vadd.f32 %v1454, %v1474
      %v1494 = vadd.f32 %v1455, %v1474
      %v1495 = vadd.f32 %v1456, %v1474
      %v1496 = vadd.f32 %v1457, %v1474
      %v1497 = vadd.f32 %v1458, %v1474
      %v1498 = vadd.f32 %v1459, %v1474
      %v1499 = vadd.f32 %v1460, %v1474
      %v1500 = vadd.f32 %v1461, %v1474
      %v1501 = vadd.f32 %v1462, %v1474
      %v1502 = vadd.f32 %v1463, %v1474
      %v1503 = vadd.f32 %v1464, %v1474
      %v1504 = vadd.f32 %v1465, %v1474
      %v1505 = vadd.f32 %v1466, %v1474
      %v1506 = vadd.f32 %v1467, %v1474
      %v1507 = vadd.f32 %v1468, %v1474
      %v1508 = vmax.f32 %v1476, 0.0
      %v1509 = vmax.f32 %v1477, 0.0
      %v1510 = vmax.f32 %v1478, 0.0
      %v1511 = vmax.f32 %v1479, 0.0
      %v1512 = vmax.f32 %v1480, 0.0
      %v1513 = vmax.f32 %v1481, 0.0
      %v1514 = vmax.f32 %v1482, 0.0
      %v1515 = vmax.f32 %v1483, 0.0
      %v1516 = vmax.f32 %v1484, 0.0
      %v1517 = vmax.f32 %v1485, 0.0
      %v1518 = vmax.f32 %v1486, 0.0
      %v1519 = vmax.f32 %v1487, 0.0
      %v1520 = vmax.f32 %v1488, 0.0
      %v1521 = vmax.f32 %v1489, 0.0
      %v1522 = vmax.f32 %v1490, 0.0
      %v1523 = vmax.f32 %v1491, 0.0
      %v1524 = vmax.f32 %v1492, 0.0
      %v1525 = vmax.f32 %v1493, 0.0
      %v1526 = vmax.f32 %v1494, 0.0
      %v1527 = vmax.f32 %v1495, 0.0
      %v1528 = vmax.f32 %v1496, 0.0
      %v1529 = vmax.f32 %v1497, 0.0
      %v1530 = vmax.f32 %v1498, 0.0
      %v1531 = vmax.f32 %v1499, 0.0
      %v1532 = vmax.f32 %v1500, 0.0
      %v1533 = vmax.f32 %v1501, 0.0
      %v1534 = vmax.f32 %v1502, 0.0
      %v1535 = vmax.f32 %v1503, 0.0
      %v1536 = vmax.f32 %v1504, 0.0
      %v1537 = vmax.f32 %v1505, 0.0
      %v1538 = vmax.f32 %v1506, 0.0
      %v1539 = vmax.f32 %v1507, 0.0
      %v1540 = vpack.c.bf16 %v1509, %v1508
      %v1541 = vpack.c.bf16 %v1511, %v1510
      %v1542 = vpack.c.bf16 %v1513, %v1512
      %v1543 = vpack.c.bf16 %v1515, %v1514
      %v1544 = vpack.c.bf16 %v1517, %v1516
      %v1545 = vpack.c.bf16 %v1519, %v1518
      %v1546 = vpack.c.bf16 %v1521, %v1520
      %v1547 = vpack.c.bf16 %v1523, %v1522
      %v1548 = vpack.c.bf16 %v1525, %v1524
      %v1549 = vpack.c.bf16 %v1527, %v1526
      %v1550 = vpack.c.bf16 %v1529, %v1528
      %v1551 = vpack.c.bf16 %v1531, %v1530
      %v1552 = vpack.c.bf16 %v1533, %v1532
      %v1553 = vpack.c.bf16 %v1535, %v1534
      %v1554 = vpack.c.bf16 %v1537, %v1536
      %v1555 = vpack.c.bf16 %v1539, %v1538
      %v1556 = vld [vmem:[%s4] sm:$0xf]
      %v1557 = vld [vmem:[%s4 + $0x4] sm:$0xf]
      %v1558 = vld [vmem:[%s4 + $0x8] sm:$0xf]
      %v1559 = vld [vmem:[%s4 + $0xc] sm:$0xf]
      %v1560 = vld [vmem:[%s4 + $0x10] sm:$0xf]
      %v1561 = vld [vmem:[%s4 + $0x14] sm:$0xf]
      %v1562 = vld [vmem:[%s4 + $0x18] sm:$0xf]
      %v1563 = vld [vmem:[%s4 + $0x1c] sm:$0xf]
      %v1564 = vld [vmem:[%s4 + $0x20] sm:$0xf]
      %v1565 = vld [vmem:[%s4 + $0x24] sm:$0xf]
      %v1566 = vld [vmem:[%s4 + $0x28] sm:$0xf]
      %v1567 = vld [vmem:[%s4 + $0x2c] sm:$0xf]
      %v1568 = vld [vmem:[%s4 + $0x30] sm:$0xf]
      %v1569 = vld [vmem:[%s4 + $0x34] sm:$0xf]
      %v1570 = vld [vmem:[%s4 + $0x38] sm:$0xf]
      %v1571 = vld [vmem:[%s4 + $0x3c] sm:$0xf]
      %v1572 = vld [vmem:[%s1 + $0x4] sm:$0xf]
      %v1573 = vld [vmem:[%s1 + $0xc] sm:$0xf]
      %v1574 = vld [vmem:[%s1 + $0x14] sm:$0xf]
      %v1575 = vld [vmem:[%s1 + $0x1c] sm:$0xf]
      %v1576 = vld [vmem:[%s1 + $0x24] sm:$0xf]
      %v1577 = vld [vmem:[%s1 + $0x2c] sm:$0xf]
      %v1578 = vld [vmem:[%s1 + $0x34] sm:$0xf]
      %v1579 = vld [vmem:[%s1 + $0x3c] sm:$0xf]
      %v1580 = vld [vmem:[%s1 + $0x44] sm:$0xf]
      %v1581 = vld [vmem:[%s1 + $0x4c] sm:$0xf]
      %v1582 = vld [vmem:[%s1 + $0x54] sm:$0xf]
      %v1583 = vld [vmem:[%s1 + $0x5c] sm:$0xf]
      %v1584 = vld [vmem:[%s360 + $0x4] sm:$0xf]
      %v1585 = vld [vmem:[%s360 + $0xc] sm:$0xf]
      %v1586 = vld [vmem:[%s360 + $0x14] sm:$0xf]
      %v1587 = vld [vmem:[%s360 + $0x1c] sm:$0xf]
      %v1588 = vld [vmem:[%s360 + $0x24] sm:$0xf]
      %v1589 = vld [vmem:[%s360 + $0x2c] sm:$0xf]
      %v1590 = vld [vmem:[%s360 + $0x34] sm:$0xf]
      %v1591 = vld [vmem:[%s360 + $0x3c] sm:$0xf]
      %v1592 = vld [vmem:[%s360 + $0x44] sm:$0xf]
      %v1593 = vld [vmem:[%s360 + $0x4c] sm:$0xf]
      %v1594 = vld [vmem:[%s360 + $0x54] sm:$0xf]
      %v1595 = vld [vmem:[%s360 + $0x5c] sm:$0xf]
      %v1608 = vunpack.c.l.b16 %v1584
      %v1609 = vunpack.c.l.b16 %v1585
      %v1610 = vunpack.c.l.b16 %v1586
      %v1611 = vunpack.c.l.b16 %v1587
      %v1612 = vunpack.c.l.b16 %v1588
      %v1613 = vunpack.c.l.b16 %v1589
      %v1614 = vunpack.c.l.b16 %v1590
      %v1615 = vunpack.c.l.b16 %v1591
      %v1616 = vunpack.c.l.b16 %v1592
      %v1617 = vunpack.c.l.b16 %v1593
      %v1618 = vunpack.c.l.b16 %v1594
      %v1619 = vunpack.c.l.b16 %v1595
      %v1620 = vpack.c.b16 %v1609, %v1608
      %v1621 = vpack.c.b16 %v1611, %v1610
      %v1622 = vpack.c.b16 %v1613, %v1612
      %v1623 = vpack.c.b16 %v1615, %v1614
      %v1624 = vpack.c.b16 %v1617, %v1616
      %v1625 = vpack.c.b16 %v1619, %v1618
      %1632 = vmatprep.subr.bf16.mxu0 0
      %1633 = vmatpush1.bf16.msra.mxu0 %v1620
      %1634 = vmatprep.subr.bf16.mxu0 0
      %1635 = vmatpush1.bf16.msra.mxu0 %v1621
      %1636 = vmatprep.subr.bf16.mxu0 0
      %1637 = vmatpush1.bf16.msra.mxu0 %v1622
      %1638 = vmatprep.subr.bf16.mxu0 0
      %1639 = vmatpush1.bf16.msra.mxu0 %v1623
      %1640 = vmatprep.subr.bf16.mxu0 0
      %1641 = vmatpush1.bf16.msra.mxu0 %v1624
      %1642 = vmatprep.subr.bf16.mxu0 0
      %1643 = vmatpush1.bf16.msra.mxu0 %v1625
      %1644 = vmatprep.subr.bf16.mxu0 0
      %1645 = vmatpush1.bf16.msra.mxu0 0
      %1646 = vmatprep.subr.bf16.mxu0 0
      %1647 = vmatpush1.bf16.msra.mxu0 0
      %1648 = vmatprep.subr.bf16.mxu0 0
      %1649 = vmatpush1.bf16.msra.mxu0 0
      %1650 = vmatprep.subr.bf16.mxu0 0
      %1651 = vmatpush1.bf16.msra.mxu0 0
      %1652 = vmatprep.subr.bf16.mxu0 0
      %1653 = vmatpush1.bf16.msra.mxu0 0
      %1654 = vmatprep.subr.bf16.mxu0 0
      %1655 = vmatpush1.bf16.msra.mxu0 0
      %1656 = vmatprep.subr.bf16.mxu0 0
      %1657 = vmatpush1.bf16.msra.mxu0 0
      %1658 = vmatprep.subr.bf16.mxu0 0
      %1659 = vmatpush1.bf16.msra.mxu0 0
      %1660 = vmatprep.subr.bf16.mxu0 0
      %1661 = vmatpush1.bf16.msra.mxu0 0
      %1662 = vmatprep.subr.bf16.mxu0 0
      %1663 = vmatpush1.bf16.msra.mxu0 0
      %1664 = vmatprep.mubr.bf16.mxu0 0
      %1665 = vmatmul.mubr.bf16.gmra.mrb[0].mxu0 %v491
      %v1666 = vpop.f32.mrb[0].mxu0
      %v1667 = vadd.f32 0.0, %v1666
      %v1668 = vpop.f32.mrb[0].mxu0
      %v1669 = vpop.f32.mrb[0].mxu0
      %v1670 = vadd.f32 0.0, %v1669
      %v1671 = vpop.f32.mrb[0].mxu0
      %1672 = vmatprep.mubr.bf16.mxu0 0
      %1673 = vmatmul.mubr.bf16.gmra.mrb[0].mxu0 %v494
      %v1674 = vpop.f32.mrb[0].mxu0
      %v1675 = vadd.f32 0.0, %v1674
      %v1676 = vpop.f32.mrb[0].mxu0
      %v1677 = vpop.f32.mrb[0].mxu0
      %v1678 = vadd.f32 0.0, %v1677
      %v1679 = vpop.f32.mrb[0].mxu0
      %1680 = vmatprep.mubr.bf16.mxu0 0
      %1681 = vmatmul.mubr.bf16.gmra.mrb[0].mxu0 %v497
      %v1682 = vpop.f32.mrb[0].mxu0
      %v1683 = vadd.f32 0.0, %v1682
      %v1684 = vpop.f32.mrb[0].mxu0
      %v1685 = vpop.f32.mrb[0].mxu0
      %v1686 = vadd.f32 0.0, %v1685
      %v1687 = vpop.f32.mrb[0].mxu0
      %1688 = vmatprep.mubr.bf16.mxu0 0
      %1689 = vmatmul.mubr.bf16.gmra.mrb[0].mxu0 %v500
      %v1690 = vpop.f32.mrb[0].mxu0
      %v1691 = vadd.f32 0.0, %v1690
      %v1692 = vpop.f32.mrb[0].mxu0
      %v1693 = vpop.f32.mrb[0].mxu0
      %v1694 = vadd.f32 0.0, %v1693
      %v1695 = vpop.f32.mrb[0].mxu0
      %1696 = vmatprep.mubr.bf16.mxu0 0
      %1697 = vmatmul.mubr.bf16.gmra.mrb[0].mxu0 %v503
      %v1698 = vpop.f32.mrb[0].mxu0
      %v1699 = vadd.f32 0.0, %v1698
      %v1700 = vpop.f32.mrb[0].mxu0
      %v1701 = vpop.f32.mrb[0].mxu0
      %v1702 = vadd.f32 0.0, %v1701
      %v1703 = vpop.f32.mrb[0].mxu0
      %1704 = vmatprep.mubr.bf16.mxu0 0
      %1705 = vmatmul.mubr.bf16.gmra.mrb[0].mxu0 %v506
      %v1706 = vpop.f32.mrb[0].mxu0
      %v1707 = vadd.f32 0.0, %v1706
      %v1708 = vpop.f32.mrb[0].mxu0
      %v1709 = vpop.f32.mrb[0].mxu0
      %v1710 = vadd.f32 0.0, %v1709
      %v1711 = vpop.f32.mrb[0].mxu0
      %1712 = vmatprep.mubr.bf16.mxu0 0
      %1713 = vmatmul.mubr.bf16.gmra.mrb[0].mxu0 %v509
      %v1714 = vpop.f32.mrb[0].mxu0
      %v1715 = vadd.f32 0.0, %v1714
      %v1716 = vpop.f32.mrb[0].mxu0
      %v1717 = vpop.f32.mrb[0].mxu0
      %v1718 = vadd.f32 0.0, %v1717
      %v1719 = vpop.f32.mrb[0].mxu0
      %1720 = vmatprep.mubr.bf16.mxu0 0
      %1721 = vmatmul.mubr.bf16.gmra.mrb[0].mxu0 %v512
      %v1722 = vpop.f32.mrb[0].mxu0
      %v1723 = vadd.f32 0.0, %v1722
      %v1724 = vpop.f32.mrb[0].mxu0
      %v1725 = vpop.f32.mrb[0].mxu0
      %v1726 = vadd.f32 0.0, %v1725
      %v1727 = vpop.f32.mrb[0].mxu0
      %1728 = vmatprep.mubr.bf16.mxu0 0
      %1729 = vmatmul.mubr.bf16.gmra.mrb[0].mxu0 %v515
      %v1730 = vpop.f32.mrb[0].mxu0
      %v1731 = vadd.f32 0.0, %v1730
      %v1732 = vpop.f32.mrb[0].mxu0
      %v1733 = vpop.f32.mrb[0].mxu0
      %v1734 = vadd.f32 0.0, %v1733
      %v1735 = vpop.f32.mrb[0].mxu0
      %1736 = vmatprep.mubr.bf16.mxu0 0
      %1737 = vmatmul.mubr.bf16.gmra.mrb[0].mxu0 %v518
      %v1738 = vpop.f32.mrb[0].mxu0
      %v1739 = vadd.f32 0.0, %v1738
      %v1740 = vpop.f32.mrb[0].mxu0
      %v1741 = vpop.f32.mrb[0].mxu0
      %v1742 = vadd.f32 0.0, %v1741
      %v1743 = vpop.f32.mrb[0].mxu0
      %1744 = vmatprep.mubr.bf16.mxu0 0
      %1745 = vmatmul.mubr.bf16.gmra.mrb[0].mxu0 %v521
      %v1746 = vpop.f32.mrb[0].mxu0
      %v1747 = vadd.f32 0.0, %v1746
      %v1748 = vpop.f32.mrb[0].mxu0
      %v1749 = vpop.f32.mrb[0].mxu0
      %v1750 = vadd.f32 0.0, %v1749
      %v1751 = vpop.f32.mrb[0].mxu0
      %1752 = vmatprep.mubr.bf16.mxu0 0
      %1753 = vmatmul.mubr.bf16.gmra.mrb[0].mxu0 %v524
      %v1754 = vpop.f32.mrb[0].mxu0
      %v1755 = vadd.f32 0.0, %v1754
      %v1756 = vpop.f32.mrb[0].mxu0
      %v1757 = vpop.f32.mrb[0].mxu0
      %v1758 = vadd.f32 0.0, %v1757
      %v1759 = vpop.f32.mrb[0].mxu0
      %1760 = vmatprep.mubr.bf16.mxu0 0
      %1761 = vmatmul.mubr.bf16.gmra.mrb[0].mxu0 %v527
      %v1762 = vpop.f32.mrb[0].mxu0
      %v1763 = vadd.f32 0.0, %v1762
      %v1764 = vpop.f32.mrb[0].mxu0
      %v1765 = vpop.f32.mrb[0].mxu0
      %v1766 = vadd.f32 0.0, %v1765
      %v1767 = vpop.f32.mrb[0].mxu0
      %1768 = vmatprep.mubr.bf16.mxu0 0
      %1769 = vmatmul.mubr.bf16.gmra.mrb[0].mxu0 %v530
      %v1770 = vpop.f32.mrb[0].mxu0
      %v1771 = vadd.f32 0.0, %v1770
      %v1772 = vpop.f32.mrb[0].mxu0
      %v1773 = vpop.f32.mrb[0].mxu0
      %v1774 = vadd.f32 0.0, %v1773
      %v1775 = vpop.f32.mrb[0].mxu0
      %1776 = vmatprep.mubr.bf16.mxu0 0
      %1777 = vmatmul.mubr.bf16.gmra.mrb[0].mxu0 %v533
      %v1778 = vpop.f32.mrb[0].mxu0
      %v1779 = vadd.f32 0.0, %v1778
      %v1780 = vpop.f32.mrb[0].mxu0
      %v1781 = vpop.f32.mrb[0].mxu0
      %v1782 = vadd.f32 0.0, %v1781
      %v1783 = vpop.f32.mrb[0].mxu0
      %1784 = vmatprep.mubr.bf16.mxu0 0
      %1785 = vmatmul.mubr.bf16.gmra.mrb[0].mxu0 %v536
      %v1786 = vpop.f32.mrb[0].mxu0
      %v1787 = vadd.f32 0.0, %v1786
      %v1788 = vpop.f32.mrb[0].mxu0
      %v1789 = vpop.f32.mrb[0].mxu0
      %v1790 = vadd.f32 0.0, %v1789
      %v1791 = vpop.f32.mrb[0].mxu0
      %1792 = vdwg.mxu0
      %v1805 = vunpack.c.l.b16 %v1572
      %v1806 = vunpack.c.l.b16 %v1573
      %v1807 = vunpack.c.l.b16 %v1574
      %v1808 = vunpack.c.l.b16 %v1575
      %v1809 = vunpack.c.l.b16 %v1576
      %v1810 = vunpack.c.l.b16 %v1577
      %v1811 = vunpack.c.l.b16 %v1578
      %v1812 = vunpack.c.l.b16 %v1579
      %v1813 = vunpack.c.l.b16 %v1580
      %v1814 = vunpack.c.l.b16 %v1581
      %v1815 = vunpack.c.l.b16 %v1582
      %v1816 = vunpack.c.l.b16 %v1583
      %v1817 = vpack.c.b16 %v1806, %v1805
      %v1818 = vpack.c.b16 %v1808, %v1807
      %v1819 = vpack.c.b16 %v1810, %v1809
      %v1820 = vpack.c.b16 %v1812, %v1811
      %v1821 = vpack.c.b16 %v1814, %v1813
      %v1822 = vpack.c.b16 %v1816, %v1815
      %1829 = vmatprep.subr.bf16.mxu0 0
      %1830 = vmatpush1.bf16.msra.mxu0 %v1817
      %1831 = vmatprep.subr.bf16.mxu0 0
      %1832 = vmatpush1.bf16.msra.mxu0 %v1818
      %1833 = vmatprep.subr.bf16.mxu0 0
      %1834 = vmatpush1.bf16.msra.mxu0 %v1819
      %1835 = vmatprep.subr.bf16.mxu0 0
      %1836 = vmatpush1.bf16.msra.mxu0 %v1820
      %1837 = vmatprep.subr.bf16.mxu0 0
      %1838 = vmatpush1.bf16.msra.mxu0 %v1821
      %1839 = vmatprep.subr.bf16.mxu0 0
      %1840 = vmatpush1.bf16.msra.mxu0 %v1822
      %1841 = vmatprep.subr.bf16.mxu0 0
      %1842 = vmatpush1.bf16.msra.mxu0 0
      %1843 = vmatprep.subr.bf16.mxu0 0
      %1844 = vmatpush1.bf16.msra.mxu0 0
      %1845 = vmatprep.subr.bf16.mxu0 0
      %1846 = vmatpush1.bf16.msra.mxu0 0
      %1847 = vmatprep.subr.bf16.mxu0 0
      %1848 = vmatpush1.bf16.msra.mxu0 0
      %1849 = vmatprep.subr.bf16.mxu0 0
      %1850 = vmatpush1.bf16.msra.mxu0 0
      %1851 = vmatprep.subr.bf16.mxu0 0
      %1852 = vmatpush1.bf16.msra.mxu0 0
      %1853 = vmatprep.subr.bf16.mxu0 0
      %1854 = vmatpush1.bf16.msra.mxu0 0
      %1855 = vmatprep.subr.bf16.mxu0 0
      %1856 = vmatpush1.bf16.msra.mxu0 0
      %1857 = vmatprep.subr.bf16.mxu0 0
      %1858 = vmatpush1.bf16.msra.mxu0 0
      %1859 = vmatprep.subr.bf16.mxu0 0
      %1860 = vmatpush1.bf16.msra.mxu0 0
      %1861 = vmatprep.mubr.bf16.mxu0 0
      %1862 = vmatmul.mubr.bf16.gmra.mrb[0].mxu0 %v816
      %v1863 = vpop.f32.mrb[0].mxu0
      %v1864 = vadd.f32 %v1667, %v1863
      %v1865 = vpop.f32.mrb[0].mxu0
      %v1866 = vpop.f32.mrb[0].mxu0
      %v1867 = vadd.f32 %v1670, %v1866
      %v1868 = vpop.f32.mrb[0].mxu0
      %1869 = vmatprep.mubr.bf16.mxu0 0
      %1870 = vmatmul.mubr.bf16.gmra.mrb[0].mxu0 %v819
      %v1871 = vpop.f32.mrb[0].mxu0
      %v1872 = vadd.f32 %v1675, %v1871
      %v1873 = vpop.f32.mrb[0].mxu0
      %v1874 = vpop.f32.mrb[0].mxu0
      %v1875 = vadd.f32 %v1678, %v1874
      %v1876 = vpop.f32.mrb[0].mxu0
      %1877 = vmatprep.mubr.bf16.mxu0 0
      %1878 = vmatmul.mubr.bf16.gmra.mrb[0].mxu0 %v822
      %v1879 = vpop.f32.mrb[0].mxu0
      %v1880 = vadd.f32 %v1683, %v1879
      %v1881 = vpop.f32.mrb[0].mxu0
      %v1882 = vpop.f32.mrb[0].mxu0
      %v1883 = vadd.f32 %v1686, %v1882
      %v1884 = vpop.f32.mrb[0].mxu0
      %1885 = vmatprep.mubr.bf16.mxu0 0
      %1886 = vmatmul.mubr.bf16.gmra.mrb[0].mxu0 %v825
      %v1887 = vpop.f32.mrb[0].mxu0
      %v1888 = vadd.f32 %v1691, %v1887
      %v1889 = vpop.f32.mrb[0].mxu0
      %v1890 = vpop.f32.mrb[0].mxu0
      %v1891 = vadd.f32 %v1694, %v1890
      %v1892 = vpop.f32.mrb[0].mxu0
      %1893 = vmatprep.mubr.bf16.mxu0 0
      %1894 = vmatmul.mubr.bf16.gmra.mrb[0].mxu0 %v828
      %v1895 = vpop.f32.mrb[0].mxu0
      %v1896 = vadd.f32 %v1699, %v1895
      %v1897 = vpop.f32.mrb[0].mxu0
      %v1898 = vpop.f32.mrb[0].mxu0
      %v1899 = vadd.f32 %v1702, %v1898
      %v1900 = vpop.f32.mrb[0].mxu0
      %1901 = vmatprep.mubr.bf16.mxu0 0
      %1902 = vmatmul.mubr.bf16.gmra.mrb[0].mxu0 %v831
      %v1903 = vpop.f32.mrb[0].mxu0
      %v1904 = vadd.f32 %v1707, %v1903
      %v1905 = vpop.f32.mrb[0].mxu0
      %v1906 = vpop.f32.mrb[0].mxu0
      %v1907 = vadd.f32 %v1710, %v1906
      %v1908 = vpop.f32.mrb[0].mxu0
      %1909 = vmatprep.mubr.bf16.mxu0 0
      %1910 = vmatmul.mubr.bf16.gmra.mrb[0].mxu0 %v834
      %v1911 = vpop.f32.mrb[0].mxu0
      %v1912 = vadd.f32 %v1715, %v1911
      %v1913 = vpop.f32.mrb[0].mxu0
      %v1914 = vpop.f32.mrb[0].mxu0
      %v1915 = vadd.f32 %v1718, %v1914
      %v1916 = vpop.f32.mrb[0].mxu0
      %1917 = vmatprep.mubr.bf16.mxu0 0
      %1918 = vmatmul.mubr.bf16.gmra.mrb[0].mxu0 %v837
      %v1919 = vpop.f32.mrb[0].mxu0
      %v1920 = vadd.f32 %v1723, %v1919
      %v1921 = vpop.f32.mrb[0].mxu0
      %v1922 = vpop.f32.mrb[0].mxu0
      %v1923 = vadd.f32 %v1726, %v1922
      %v1924 = vpop.f32.mrb[0].mxu0
      %1925 = vmatprep.mubr.bf16.mxu0 0
      %1926 = vmatmul.mubr.bf16.gmra.mrb[0].mxu0 %v840
      %v1927 = vpop.f32.mrb[0].mxu0
      %v1928 = vadd.f32 %v1731, %v1927
      %v1929 = vpop.f32.mrb[0].mxu0
      %v1930 = vpop.f32.mrb[0].mxu0
      %v1931 = vadd.f32 %v1734, %v1930
      %v1932 = vpop.f32.mrb[0].mxu0
      %1933 = vmatprep.mubr.bf16.mxu0 0
      %1934 = vmatmul.mubr.bf16.gmra.mrb[0].mxu0 %v843
      %v1935 = vpop.f32.mrb[0].mxu0
      %v1936 = vadd.f32 %v1739, %v1935
      %v1937 = vpop.f32.mrb[0].mxu0
      %v1938 = vpop.f32.mrb[0].mxu0
      %v1939 = vadd.f32 %v1742, %v1938
      %v1940 = vpop.f32.mrb[0].mxu0
      %1941 = vmatprep.mubr.bf16.mxu0 0
      %1942 = vmatmul.mubr.bf16.gmra.mrb[0].mxu0 %v846
      %v1943 = vpop.f32.mrb[0].mxu0
      %v1944 = vadd.f32 %v1747, %v1943
      %v1945 = vpop.f32.mrb[0].mxu0
      %v1946 = vpop.f32.mrb[0].mxu0
      %v1947 = vadd.f32 %v1750, %v1946
      %v1948 = vpop.f32.mrb[0].mxu0
      %1949 = vmatprep.mubr.bf16.mxu0 0
      %1950 = vmatmul.mubr.bf16.gmra.mrb[0].mxu0 %v849
      %v1951 = vpop.f32.mrb[0].mxu0
      %v1952 = vadd.f32 %v1755, %v1951
      %v1953 = vpop.f32.mrb[0].mxu0
      %v1954 = vpop.f32.mrb[0].mxu0
      %v1955 = vadd.f32 %v1758, %v1954
      %v1956 = vpop.f32.mrb[0].mxu0
      %1957 = vmatprep.mubr.bf16.mxu0 0
      %1958 = vmatmul.mubr.bf16.gmra.mrb[0].mxu0 %v852
      %v1959 = vpop.f32.mrb[0].mxu0
      %v1960 = vadd.f32 %v1763, %v1959
      %v1961 = vpop.f32.mrb[0].mxu0
      %v1962 = vpop.f32.mrb[0].mxu0
      %v1963 = vadd.f32 %v1766, %v1962
      %v1964 = vpop.f32.mrb[0].mxu0
      %1965 = vmatprep.mubr.bf16.mxu0 0
      %1966 = vmatmul.mubr.bf16.gmra.mrb[0].mxu0 %v855
      %v1967 = vpop.f32.mrb[0].mxu0
      %v1968 = vadd.f32 %v1771, %v1967
      %v1969 = vpop.f32.mrb[0].mxu0
      %v1970 = vpop.f32.mrb[0].mxu0
      %v1971 = vadd.f32 %v1774, %v1970
      %v1972 = vpop.f32.mrb[0].mxu0
      %1973 = vmatprep.mubr.bf16.mxu0 0
      %1974 = vmatmul.mubr.bf16.gmra.mrb[0].mxu0 %v858
      %v1975 = vpop.f32.mrb[0].mxu0
      %v1976 = vadd.f32 %v1779, %v1975
      %v1977 = vpop.f32.mrb[0].mxu0
      %v1978 = vpop.f32.mrb[0].mxu0
      %v1979 = vadd.f32 %v1782, %v1978
      %v1980 = vpop.f32.mrb[0].mxu0
      %1981 = vmatprep.mubr.bf16.mxu0 0
      %1982 = vmatmul.mubr.bf16.gmra.mrb[0].mxu0 %v861
      %v1983 = vpop.f32.mrb[0].mxu0
      %v1984 = vadd.f32 %v1787, %v1983
      %v1985 = vpop.f32.mrb[0].mxu0
      %v1986 = vpop.f32.mrb[0].mxu0
      %v1987 = vadd.f32 %v1790, %v1986
      %v1988 = vpop.f32.mrb[0].mxu0
      %1989 = vdwg.mxu0
      %v1990 = vld [vmem:[%s1060 + $0x4] sm:$0xf]
      %v1991 = vld [vmem:[%s1060 + $0xc] sm:$0xf]
      %v1992 = vld [vmem:[%s1060 + $0x14] sm:$0xf]
      %v1993 = vld [vmem:[%s1060 + $0x1c] sm:$0xf]
      %v1994 = vld [vmem:[%s1060 + $0x24] sm:$0xf]
      %v1995 = vld [vmem:[%s1060 + $0x2c] sm:$0xf]
      %v1996 = vld [vmem:[%s1060 + $0x34] sm:$0xf]
      %v1997 = vld [vmem:[%s1060 + $0x3c] sm:$0xf]
      %v1998 = vld [vmem:[%s1060 + $0x44] sm:$0xf]
      %v1999 = vld [vmem:[%s1060 + $0x4c] sm:$0xf]
      %v2000 = vld [vmem:[%s1060 + $0x54] sm:$0xf]
      %v2001 = vld [vmem:[%s1060 + $0x5c] sm:$0xf]
      %v2014 = vunpack.c.l.b16 %v1990
      %v2015 = vunpack.c.l.b16 %v1991
      %v2016 = vunpack.c.l.b16 %v1992
      %v2017 = vunpack.c.l.b16 %v1993
      %v2018 = vunpack.c.l.b16 %v1994
      %v2019 = vunpack.c.l.b16 %v1995
      %v2020 = vunpack.c.l.b16 %v1996
      %v2021 = vunpack.c.l.b16 %v1997
      %v2022 = vunpack.c.l.b16 %v1998
      %v2023 = vunpack.c.l.b16 %v1999
      %v2024 = vunpack.c.l.b16 %v2000
      %v2025 = vunpack.c.l.b16 %v2001
      %v2026 = vpack.c.b16 %v2015, %v2014
      %v2027 = vpack.c.b16 %v2017, %v2016
      %v2028 = vpack.c.b16 %v2019, %v2018
      %v2029 = vpack.c.b16 %v2021, %v2020
      %v2030 = vpack.c.b16 %v2023, %v2022
      %v2031 = vpack.c.b16 %v2025, %v2024
      %2038 = vmatprep.subr.bf16.mxu0 0
      %2039 = vmatpush1.bf16.msra.mxu0 %v2026
      %2040 = vmatprep.subr.bf16.mxu0 0
      %2041 = vmatpush1.bf16.msra.mxu0 %v2027
      %2042 = vmatprep.subr.bf16.mxu0 0
      %2043 = vmatpush1.bf16.msra.mxu0 %v2028
      %2044 = vmatprep.subr.bf16.mxu0 0
      %2045 = vmatpush1.bf16.msra.mxu0 %v2029
      %2046 = vmatprep.subr.bf16.mxu0 0
      %2047 = vmatpush1.bf16.msra.mxu0 %v2030
      %2048 = vmatprep.subr.bf16.mxu0 0
      %2049 = vmatpush1.bf16.msra.mxu0 %v2031
      %2050 = vmatprep.subr.bf16.mxu0 0
      %2051 = vmatpush1.bf16.msra.mxu0 0
      %2052 = vmatprep.subr.bf16.mxu0 0
      %2053 = vmatpush1.bf16.msra.mxu0 0
      %2054 = vmatprep.subr.bf16.mxu0 0
      %2055 = vmatpush1.bf16.msra.mxu0 0
      %2056 = vmatprep.subr.bf16.mxu0 0
      %2057 = vmatpush1.bf16.msra.mxu0 0
      %2058 = vmatprep.subr.bf16.mxu0 0
      %2059 = vmatpush1.bf16.msra.mxu0 0
      %2060 = vmatprep.subr.bf16.mxu0 0
      %2061 = vmatpush1.bf16.msra.mxu0 0
      %2062 = vmatprep.subr.bf16.mxu0 0
      %2063 = vmatpush1.bf16.msra.mxu0 0
      %2064 = vmatprep.subr.bf16.mxu0 0
      %2065 = vmatpush1.bf16.msra.mxu0 0
      %2066 = vmatprep.subr.bf16.mxu0 0
      %2067 = vmatpush1.bf16.msra.mxu0 0
      %2068 = vmatprep.subr.bf16.mxu0 0
      %2069 = vmatpush1.bf16.msra.mxu0 0
      %2070 = vmatprep.mubr.bf16.mxu0 0
      %2071 = vmatmul.mubr.bf16.gmra.mrb[0].mxu0 %v1190
      %v2072 = vpop.f32.mrb[0].mxu0
      %v2073 = vadd.f32 0.0, %v2072
      %v2074 = vpop.f32.mrb[0].mxu0
      %v2075 = vpop.f32.mrb[0].mxu0
      %v2076 = vadd.f32 0.0, %v2075
      %v2077 = vpop.f32.mrb[0].mxu0
      %2078 = vmatprep.mubr.bf16.mxu0 0
      %2079 = vmatmul.mubr.bf16.gmra.mrb[0].mxu0 %v1193
      %v2080 = vpop.f32.mrb[0].mxu0
      %v2081 = vadd.f32 0.0, %v2080
      %v2082 = vpop.f32.mrb[0].mxu0
      %v2083 = vpop.f32.mrb[0].mxu0
      %v2084 = vadd.f32 0.0, %v2083
      %v2085 = vpop.f32.mrb[0].mxu0
      %2086 = vmatprep.mubr.bf16.mxu0 0
      %2087 = vmatmul.mubr.bf16.gmra.mrb[0].mxu0 %v1196
      %v2088 = vpop.f32.mrb[0].mxu0
      %v2089 = vadd.f32 0.0, %v2088
      %v2090 = vpop.f32.mrb[0].mxu0
      %v2091 = vpop.f32.mrb[0].mxu0
      %v2092 = vadd.f32 0.0, %v2091
      %v2093 = vpop.f32.mrb[0].mxu0
      %2094 = vmatprep.mubr.bf16.mxu0 0
      %2095 = vmatmul.mubr.bf16.gmra.mrb[0].mxu0 %v1199
      %v2096 = vpop.f32.mrb[0].mxu0
      %v2097 = vadd.f32 0.0, %v2096
      %v2098 = vpop.f32.mrb[0].mxu0
      %v2099 = vpop.f32.mrb[0].mxu0
      %v2100 = vadd.f32 0.0, %v2099
      %v2101 = vpop.f32.mrb[0].mxu0
      %2102 = vmatprep.mubr.bf16.mxu0 0
      %2103 = vmatmul.mubr.bf16.gmra.mrb[0].mxu0 %v1202
      %v2104 = vpop.f32.mrb[0].mxu0
      %v2105 = vadd.f32 0.0, %v2104
      %v2106 = vpop.f32.mrb[0].mxu0
      %v2107 = vpop.f32.mrb[0].mxu0
      %v2108 = vadd.f32 0.0, %v2107
      %v2109 = vpop.f32.mrb[0].mxu0
      %2110 = vmatprep.mubr.bf16.mxu0 0
      %2111 = vmatmul.mubr.bf16.gmra.mrb[0].mxu0 %v1205
      %v2112 = vpop.f32.mrb[0].mxu0
      %v2113 = vadd.f32 0.0, %v2112
      %v2114 = vpop.f32.mrb[0].mxu0
      %v2115 = vpop.f32.mrb[0].mxu0
      %v2116 = vadd.f32 0.0, %v2115
      %v2117 = vpop.f32.mrb[0].mxu0
      %2118 = vmatprep.mubr.bf16.mxu0 0
      %2119 = vmatmul.mubr.bf16.gmra.mrb[0].mxu0 %v1208
      %v2120 = vpop.f32.mrb[0].mxu0
      %v2121 = vadd.f32 0.0, %v2120
      %v2122 = vpop.f32.mrb[0].mxu0
      %v2123 = vpop.f32.mrb[0].mxu0
      %v2124 = vadd.f32 0.0, %v2123
      %v2125 = vpop.f32.mrb[0].mxu0
      %2126 = vmatprep.mubr.bf16.mxu0 0
      %2127 = vmatmul.mubr.bf16.gmra.mrb[0].mxu0 %v1211
      %v2128 = vpop.f32.mrb[0].mxu0
      %v2129 = vadd.f32 0.0, %v2128
      %v2130 = vpop.f32.mrb[0].mxu0
      %v2131 = vpop.f32.mrb[0].mxu0
      %v2132 = vadd.f32 0.0, %v2131
      %v2133 = vpop.f32.mrb[0].mxu0
      %2134 = vmatprep.mubr.bf16.mxu0 0
      %2135 = vmatmul.mubr.bf16.gmra.mrb[0].mxu0 %v1214
      %v2136 = vpop.f32.mrb[0].mxu0
      %v2137 = vadd.f32 0.0, %v2136
      %v2138 = vpop.f32.mrb[0].mxu0
      %v2139 = vpop.f32.mrb[0].mxu0
      %v2140 = vadd.f32 0.0, %v2139
      %v2141 = vpop.f32.mrb[0].mxu0
      %2142 = vmatprep.mubr.bf16.mxu0 0
      %2143 = vmatmul.mubr.bf16.gmra.mrb[0].mxu0 %v1217
      %v2144 = vpop.f32.mrb[0].mxu0
      %v2145 = vadd.f32 0.0, %v2144
      %v2146 = vpop.f32.mrb[0].mxu0
      %v2147 = vpop.f32.mrb[0].mxu0
      %v2148 = vadd.f32 0.0, %v2147
      %v2149 = vpop.f32.mrb[0].mxu0
      %2150 = vmatprep.mubr.bf16.mxu0 0
      %2151 = vmatmul.mubr.bf16.gmra.mrb[0].mxu0 %v1220
      %v2152 = vpop.f32.mrb[0].mxu0
      %v2153 = vadd.f32 0.0, %v2152
      %v2154 = vpop.f32.mrb[0].mxu0
      %v2155 = vpop.f32.mrb[0].mxu0
      %v2156 = vadd.f32 0.0, %v2155
      %v2157 = vpop.f32.mrb[0].mxu0
      %2158 = vmatprep.mubr.bf16.mxu0 0
      %2159 = vmatmul.mubr.bf16.gmra.mrb[0].mxu0 %v1223
      %v2160 = vpop.f32.mrb[0].mxu0
      %v2161 = vadd.f32 0.0, %v2160
      %v2162 = vpop.f32.mrb[0].mxu0
      %v2163 = vpop.f32.mrb[0].mxu0
      %v2164 = vadd.f32 0.0, %v2163
      %v2165 = vpop.f32.mrb[0].mxu0
      %2166 = vmatprep.mubr.bf16.mxu0 0
      %2167 = vmatmul.mubr.bf16.gmra.mrb[0].mxu0 %v1226
      %v2168 = vpop.f32.mrb[0].mxu0
      %v2169 = vadd.f32 0.0, %v2168
      %v2170 = vpop.f32.mrb[0].mxu0
      %v2171 = vpop.f32.mrb[0].mxu0
      %v2172 = vadd.f32 0.0, %v2171
      %v2173 = vpop.f32.mrb[0].mxu0
      %2174 = vmatprep.mubr.bf16.mxu0 0
      %2175 = vmatmul.mubr.bf16.gmra.mrb[0].mxu0 %v1229
      %v2176 = vpop.f32.mrb[0].mxu0
      %v2177 = vadd.f32 0.0, %v2176
      %v2178 = vpop.f32.mrb[0].mxu0
      %v2179 = vpop.f32.mrb[0].mxu0
      %v2180 = vadd.f32 0.0, %v2179
      %v2181 = vpop.f32.mrb[0].mxu0
      %2182 = vmatprep.mubr.bf16.mxu0 0
      %2183 = vmatmul.mubr.bf16.gmra.mrb[0].mxu0 %v1232
      %v2184 = vpop.f32.mrb[0].mxu0
      %v2185 = vadd.f32 0.0, %v2184
      %v2186 = vpop.f32.mrb[0].mxu0
      %v2187 = vpop.f32.mrb[0].mxu0
      %v2188 = vadd.f32 0.0, %v2187
      %v2189 = vpop.f32.mrb[0].mxu0
      %2190 = vmatprep.mubr.bf16.mxu0 0
      %2191 = vmatmul.mubr.bf16.gmra.mrb[0].mxu0 %v1235
      %v2192 = vpop.f32.mrb[0].mxu0
      %v2193 = vadd.f32 0.0, %v2192
      %v2194 = vpop.f32.mrb[0].mxu0
      %v2195 = vpop.f32.mrb[0].mxu0
      %v2196 = vadd.f32 0.0, %v2195
      %v2197 = vpop.f32.mrb[0].mxu0
      %2198 = vdwg.mxu0
      %v2199 = vadd.f32 %v1864, %v2073
      %v2200 = vadd.f32 %v1867, %v2076
      %v2201 = vadd.f32 %v1872, %v2081
      %v2202 = vadd.f32 %v1875, %v2084
      %v2203 = vadd.f32 %v1880, %v2089
      %v2204 = vadd.f32 %v1883, %v2092
      %v2205 = vadd.f32 %v1888, %v2097
      %v2206 = vadd.f32 %v1891, %v2100
      %v2207 = vadd.f32 %v1896, %v2105
      %v2208 = vadd.f32 %v1899, %v2108
      %v2209 = vadd.f32 %v1904, %v2113
      %v2210 = vadd.f32 %v1907, %v2116
      %v2211 = vadd.f32 %v1912, %v2121
      %v2212 = vadd.f32 %v1915, %v2124
      %v2213 = vadd.f32 %v1920, %v2129
      %v2214 = vadd.f32 %v1923, %v2132
      %v2215 = vadd.f32 %v1928, %v2137
      %v2216 = vadd.f32 %v1931, %v2140
      %v2217 = vadd.f32 %v1936, %v2145
      %v2218 = vadd.f32 %v1939, %v2148
      %v2219 = vadd.f32 %v1944, %v2153
      %v2220 = vadd.f32 %v1947, %v2156
      %v2221 = vadd.f32 %v1952, %v2161
      %v2222 = vadd.f32 %v1955, %v2164
      %v2223 = vadd.f32 %v1960, %v2169
      %v2224 = vadd.f32 %v1963, %v2172
      %v2225 = vadd.f32 %v1968, %v2177
      %v2226 = vadd.f32 %v1971, %v2180
      %v2227 = vadd.f32 %v1976, %v2185
      %v2228 = vadd.f32 %v1979, %v2188
      %v2229 = vadd.f32 %v1984, %v2193
      %v2230 = vadd.f32 %v1987, %v2196
      %v2231 = vld [vmem:[%s2 + $0x1] sm:$0x1]
      %v2233 = vlaneseq
      %v2234 = vshrl.u32 %v2233, 7
      %v2235 = vsub.s32 0, %v2234
      %v2236 = vrot.slane %v2231, %v2235
      %v2238 = vmul.f32 %v2199, %v2236
      %v2239 = vmul.f32 %v2200, %v2236
      %v2240 = vmul.f32 %v2201, %v2236
      %v2241 = vmul.f32 %v2202, %v2236
      %v2242 = vmul.f32 %v2203, %v2236
      %v2243 = vmul.f32 %v2204, %v2236
      %v2244 = vmul.f32 %v2205, %v2236
      %v2245 = vmul.f32 %v2206, %v2236
      %v2246 = vmul.f32 %v2207, %v2236
      %v2247 = vmul.f32 %v2208, %v2236
      %v2248 = vmul.f32 %v2209, %v2236
      %v2249 = vmul.f32 %v2210, %v2236
      %v2250 = vmul.f32 %v2211, %v2236
      %v2251 = vmul.f32 %v2212, %v2236
      %v2252 = vmul.f32 %v2213, %v2236
      %v2253 = vmul.f32 %v2214, %v2236
      %v2254 = vmul.f32 %v2215, %v2236
      %v2255 = vmul.f32 %v2216, %v2236
      %v2256 = vmul.f32 %v2217, %v2236
      %v2257 = vmul.f32 %v2218, %v2236
      %v2258 = vmul.f32 %v2219, %v2236
      %v2259 = vmul.f32 %v2220, %v2236
      %v2260 = vmul.f32 %v2221, %v2236
      %v2261 = vmul.f32 %v2222, %v2236
      %v2262 = vmul.f32 %v2223, %v2236
      %v2263 = vmul.f32 %v2224, %v2236
      %v2264 = vmul.f32 %v2225, %v2236
      %v2265 = vmul.f32 %v2226, %v2236
      %v2266 = vmul.f32 %v2227, %v2236
      %v2267 = vmul.f32 %v2228, %v2236
      %v2268 = vmul.f32 %v2229, %v2236
      %v2269 = vmul.f32 %v2230, %v2236
      %v2270 = vld [vmem:[%s3 + $0x1] sm:$0x1]
      %v2272 = vlaneseq
      %v2273 = vshrl.u32 %v2272, 7
      %v2274 = vsub.s32 0, %v2273
      %v2275 = vrot.slane %v2270, %v2274
      %v2277 = vadd.f32 %v2238, %v2275
      %v2278 = vadd.f32 %v2239, %v2275
      %v2279 = vadd.f32 %v2240, %v2275
      %v2280 = vadd.f32 %v2241, %v2275
      %v2281 = vadd.f32 %v2242, %v2275
      %v2282 = vadd.f32 %v2243, %v2275
      %v2283 = vadd.f32 %v2244, %v2275
      %v2284 = vadd.f32 %v2245, %v2275
      %v2285 = vadd.f32 %v2246, %v2275
      %v2286 = vadd.f32 %v2247, %v2275
      %v2287 = vadd.f32 %v2248, %v2275
      %v2288 = vadd.f32 %v2249, %v2275
      %v2289 = vadd.f32 %v2250, %v2275
      %v2290 = vadd.f32 %v2251, %v2275
      %v2291 = vadd.f32 %v2252, %v2275
      %v2292 = vadd.f32 %v2253, %v2275
      %v2293 = vadd.f32 %v2254, %v2275
      %v2294 = vadd.f32 %v2255, %v2275
      %v2295 = vadd.f32 %v2256, %v2275
      %v2296 = vadd.f32 %v2257, %v2275
      %v2297 = vadd.f32 %v2258, %v2275
      %v2298 = vadd.f32 %v2259, %v2275
      %v2299 = vadd.f32 %v2260, %v2275
      %v2300 = vadd.f32 %v2261, %v2275
      %v2301 = vadd.f32 %v2262, %v2275
      %v2302 = vadd.f32 %v2263, %v2275
      %v2303 = vadd.f32 %v2264, %v2275
      %v2304 = vadd.f32 %v2265, %v2275
      %v2305 = vadd.f32 %v2266, %v2275
      %v2306 = vadd.f32 %v2267, %v2275
      %v2307 = vadd.f32 %v2268, %v2275
      %v2308 = vadd.f32 %v2269, %v2275
      %v2309 = vmax.f32 %v2277, 0.0
      %v2310 = vmax.f32 %v2278, 0.0
      %v2311 = vmax.f32 %v2279, 0.0
      %v2312 = vmax.f32 %v2280, 0.0
      %v2313 = vmax.f32 %v2281, 0.0
      %v2314 = vmax.f32 %v2282, 0.0
      %v2315 = vmax.f32 %v2283, 0.0
      %v2316 = vmax.f32 %v2284, 0.0
      %v2317 = vmax.f32 %v2285, 0.0
      %v2318 = vmax.f32 %v2286, 0.0
      %v2319 = vmax.f32 %v2287, 0.0
      %v2320 = vmax.f32 %v2288, 0.0
      %v2321 = vmax.f32 %v2289, 0.0
      %v2322 = vmax.f32 %v2290, 0.0
      %v2323 = vmax.f32 %v2291, 0.0
      %v2324 = vmax.f32 %v2292, 0.0
      %v2325 = vmax.f32 %v2293, 0.0
      %v2326 = vmax.f32 %v2294, 0.0
      %v2327 = vmax.f32 %v2295, 0.0
      %v2328 = vmax.f32 %v2296, 0.0
      %v2329 = vmax.f32 %v2297, 0.0
      %v2330 = vmax.f32 %v2298, 0.0
      %v2331 = vmax.f32 %v2299, 0.0
      %v2332 = vmax.f32 %v2300, 0.0
      %v2333 = vmax.f32 %v2301, 0.0
      %v2334 = vmax.f32 %v2302, 0.0
      %v2335 = vmax.f32 %v2303, 0.0
      %v2336 = vmax.f32 %v2304, 0.0
      %v2337 = vmax.f32 %v2305, 0.0
      %v2338 = vmax.f32 %v2306, 0.0
      %v2339 = vmax.f32 %v2307, 0.0
      %v2340 = vmax.f32 %v2308, 0.0
      %v2341 = vpack.c.bf16 %v2310, %v2309
      %v2342 = vpack.c.bf16 %v2312, %v2311
      %v2343 = vpack.c.bf16 %v2314, %v2313
      %v2344 = vpack.c.bf16 %v2316, %v2315
      %v2345 = vpack.c.bf16 %v2318, %v2317
      %v2346 = vpack.c.bf16 %v2320, %v2319
      %v2347 = vpack.c.bf16 %v2322, %v2321
      %v2348 = vpack.c.bf16 %v2324, %v2323
      %v2349 = vpack.c.bf16 %v2326, %v2325
      %v2350 = vpack.c.bf16 %v2328, %v2327
      %v2351 = vpack.c.bf16 %v2330, %v2329
      %v2352 = vpack.c.bf16 %v2332, %v2331
      %v2353 = vpack.c.bf16 %v2334, %v2333
      %v2354 = vpack.c.bf16 %v2336, %v2335
      %v2355 = vpack.c.bf16 %v2338, %v2337
      %v2356 = vpack.c.bf16 %v2340, %v2339
      %v2357 = vld [vmem:[%s4 + $0x40] sm:$0xf]
      %v2358 = vld [vmem:[%s4 + $0x44] sm:$0xf]
      %v2359 = vld [vmem:[%s4 + $0x48] sm:$0xf]
      %v2360 = vld [vmem:[%s4 + $0x4c] sm:$0xf]
      %v2361 = vld [vmem:[%s4 + $0x50] sm:$0xf]
      %v2362 = vld [vmem:[%s4 + $0x54] sm:$0xf]
      %v2363 = vld [vmem:[%s4 + $0x58] sm:$0xf]
      %v2364 = vld [vmem:[%s4 + $0x5c] sm:$0xf]
      %v2365 = vld [vmem:[%s4 + $0x60] sm:$0xf]
      %v2366 = vld [vmem:[%s4 + $0x64] sm:$0xf]
      %v2367 = vld [vmem:[%s4 + $0x68] sm:$0xf]
      %v2368 = vld [vmem:[%s4 + $0x6c] sm:$0xf]
      %v2369 = vld [vmem:[%s4 + $0x70] sm:$0xf]
      %v2370 = vld [vmem:[%s4 + $0x74] sm:$0xf]
      %v2371 = vld [vmem:[%s4 + $0x78] sm:$0xf]
      %v2372 = vld [vmem:[%s4 + $0x7c] sm:$0xf]
      %v2389 = vunpack.c.l.b16 %v2357
      %v2390 = vunpack.c.l.b16 %v2358
      %v2391 = vunpack.c.l.b16 %v2359
      %v2392 = vunpack.c.l.b16 %v2360
      %v2393 = vunpack.c.l.b16 %v2361
      %v2394 = vunpack.c.l.b16 %v2362
      %v2395 = vunpack.c.l.b16 %v2363
      %v2396 = vunpack.c.l.b16 %v2364
      %v2397 = vunpack.c.l.b16 %v2365
      %v2398 = vunpack.c.l.b16 %v2366
      %v2399 = vunpack.c.l.b16 %v2367
      %v2400 = vunpack.c.l.b16 %v2368
      %v2401 = vunpack.c.l.b16 %v2369
      %v2402 = vunpack.c.l.b16 %v2370
      %v2403 = vunpack.c.l.b16 %v2371
      %v2404 = vunpack.c.l.b16 %v2372
      %v2405 = vpack.c.b16 %v2390, %v2389
      %v2406 = vpack.c.b16 %v2392, %v2391
      %v2407 = vpack.c.b16 %v2394, %v2393
      %v2408 = vpack.c.b16 %v2396, %v2395
      %v2409 = vpack.c.b16 %v2398, %v2397
      %v2410 = vpack.c.b16 %v2400, %v2399
      %v2411 = vpack.c.b16 %v2402, %v2401
      %v2412 = vpack.c.b16 %v2404, %v2403
      %2421 = vmatprep.subr.bf16.mxu0 0
      %2422 = vmatpush1.bf16.msra.mxu0 %v2405
      %2423 = vmatprep.subr.bf16.mxu0 0
      %2424 = vmatpush1.bf16.msra.mxu0 %v2406
      %2425 = vmatprep.subr.bf16.mxu0 0
      %2426 = vmatpush1.bf16.msra.mxu0 %v2407
      %2427 = vmatprep.subr.bf16.mxu0 0
      %2428 = vmatpush1.bf16.msra.mxu0 %v2408
      %2429 = vmatprep.subr.bf16.mxu0 0
      %2430 = vmatpush1.bf16.msra.mxu0 %v2409
      %2431 = vmatprep.subr.bf16.mxu0 0
      %2432 = vmatpush1.bf16.msra.mxu0 %v2410
      %2433 = vmatprep.subr.bf16.mxu0 0
      %2434 = vmatpush1.bf16.msra.mxu0 %v2411
      %2435 = vmatprep.subr.bf16.mxu0 0
      %2436 = vmatpush1.bf16.msra.mxu0 %v2412
      %2437 = vmatprep.subr.bf16.mxu0 0
      %2438 = vmatpush1.bf16.msra.mxu0 0
      %2439 = vmatprep.subr.bf16.mxu0 0
      %2440 = vmatpush1.bf16.msra.mxu0 0
      %2441 = vmatprep.subr.bf16.mxu0 0
      %2442 = vmatpush1.bf16.msra.mxu0 0
      %2443 = vmatprep.subr.bf16.mxu0 0
      %2444 = vmatpush1.bf16.msra.mxu0 0
      %2445 = vmatprep.subr.bf16.mxu0 0
      %2446 = vmatpush1.bf16.msra.mxu0 0
      %2447 = vmatprep.subr.bf16.mxu0 0
      %2448 = vmatpush1.bf16.msra.mxu0 0
      %2449 = vmatprep.subr.bf16.mxu0 0
      %2450 = vmatpush1.bf16.msra.mxu0 0
      %2451 = vmatprep.subr.bf16.mxu0 0
      %2452 = vmatpush1.bf16.msra.mxu0 0
      %2453 = vmatprep.mubr.bf16.mxu0 0
      %2454 = vmatmul.mubr.bf16.gmra.mrb[0].mxu0 %v2341
      %v2455 = vpop.f32.mrb[0].mxu0
      %v2456 = vadd.f32 0.0, %v2455
      %v2457 = vpop.f32.mrb[0].mxu0
      %v2458 = vpop.f32.mrb[0].mxu0
      %v2459 = vadd.f32 0.0, %v2458
      %v2460 = vpop.f32.mrb[0].mxu0
      %2461 = vmatprep.mubr.bf16.mxu0 0
      %2462 = vmatmul.mubr.bf16.gmra.mrb[0].mxu0 %v2342
      %v2463 = vpop.f32.mrb[0].mxu0
      %v2464 = vadd.f32 0.0, %v2463
      %v2465 = vpop.f32.mrb[0].mxu0
      %v2466 = vpop.f32.mrb[0].mxu0
      %v2467 = vadd.f32 0.0, %v2466
      %v2468 = vpop.f32.mrb[0].mxu0
      %2469 = vmatprep.mubr.bf16.mxu0 0
      %2470 = vmatmul.mubr.bf16.gmra.mrb[0].mxu0 %v2343
      %v2471 = vpop.f32.mrb[0].mxu0
      %v2472 = vadd.f32 0.0, %v2471
      %v2473 = vpop.f32.mrb[0].mxu0
      %v2474 = vpop.f32.mrb[0].mxu0
      %v2475 = vadd.f32 0.0, %v2474
      %v2476 = vpop.f32.mrb[0].mxu0
      %2477 = vmatprep.mubr.bf16.mxu0 0
      %2478 = vmatmul.mubr.bf16.gmra.mrb[0].mxu0 %v2344
      %v2479 = vpop.f32.mrb[0].mxu0
      %v2480 = vadd.f32 0.0, %v2479
      %v2481 = vpop.f32.mrb[0].mxu0
      %v2482 = vpop.f32.mrb[0].mxu0
      %v2483 = vadd.f32 0.0, %v2482
      %v2484 = vpop.f32.mrb[0].mxu0
      %2485 = vmatprep.mubr.bf16.mxu0 0
      %2486 = vmatmul.mubr.bf16.gmra.mrb[0].mxu0 %v2345
      %v2487 = vpop.f32.mrb[0].mxu0
      %v2488 = vadd.f32 0.0, %v2487
      %v2489 = vpop.f32.mrb[0].mxu0
      %v2490 = vpop.f32.mrb[0].mxu0
      %v2491 = vadd.f32 0.0, %v2490
      %v2492 = vpop.f32.mrb[0].mxu0
      %2493 = vmatprep.mubr.bf16.mxu0 0
      %2494 = vmatmul.mubr.bf16.gmra.mrb[0].mxu0 %v2346
      %v2495 = vpop.f32.mrb[0].mxu0
      %v2496 = vadd.f32 0.0, %v2495
      %v2497 = vpop.f32.mrb[0].mxu0
      %v2498 = vpop.f32.mrb[0].mxu0
      %v2499 = vadd.f32 0.0, %v2498
      %v2500 = vpop.f32.mrb[0].mxu0
      %2501 = vmatprep.mubr.bf16.mxu0 0
      %2502 = vmatmul.mubr.bf16.gmra.mrb[0].mxu0 %v2347
      %v2503 = vpop.f32.mrb[0].mxu0
      %v2504 = vadd.f32 0.0, %v2503
      %v2505 = vpop.f32.mrb[0].mxu0
      %v2506 = vpop.f32.mrb[0].mxu0
      %v2507 = vadd.f32 0.0, %v2506
      %v2508 = vpop.f32.mrb[0].mxu0
      %2509 = vmatprep.mubr.bf16.mxu0 0
      %2510 = vmatmul.mubr.bf16.gmra.mrb[0].mxu0 %v2348
      %v2511 = vpop.f32.mrb[0].mxu0
      %v2512 = vadd.f32 0.0, %v2511
      %v2513 = vpop.f32.mrb[0].mxu0
      %v2514 = vpop.f32.mrb[0].mxu0
      %v2515 = vadd.f32 0.0, %v2514
      %v2516 = vpop.f32.mrb[0].mxu0
      %2517 = vmatprep.mubr.bf16.mxu0 0
      %2518 = vmatmul.mubr.bf16.gmra.mrb[0].mxu0 %v2349
      %v2519 = vpop.f32.mrb[0].mxu0
      %v2520 = vadd.f32 0.0, %v2519
      %v2521 = vpop.f32.mrb[0].mxu0
      %v2522 = vpop.f32.mrb[0].mxu0
      %v2523 = vadd.f32 0.0, %v2522
      %v2524 = vpop.f32.mrb[0].mxu0
      %2525 = vmatprep.mubr.bf16.mxu0 0
      %2526 = vmatmul.mubr.bf16.gmra.mrb[0].mxu0 %v2350
      %v2527 = vpop.f32.mrb[0].mxu0
      %v2528 = vadd.f32 0.0, %v2527
      %v2529 = vpop.f32.mrb[0].mxu0
      %v2530 = vpop.f32.mrb[0].mxu0
      %v2531 = vadd.f32 0.0, %v2530
      %v2532 = vpop.f32.mrb[0].mxu0
      %2533 = vmatprep.mubr.bf16.mxu0 0
      %2534 = vmatmul.mubr.bf16.gmra.mrb[0].mxu0 %v2351
      %v2535 = vpop.f32.mrb[0].mxu0
      %v2536 = vadd.f32 0.0, %v2535
      %v2537 = vpop.f32.mrb[0].mxu0
      %v2538 = vpop.f32.mrb[0].mxu0
      %v2539 = vadd.f32 0.0, %v2538
      %v2540 = vpop.f32.mrb[0].mxu0
      %2541 = vmatprep.mubr.bf16.mxu0 0
      %2542 = vmatmul.mubr.bf16.gmra.mrb[0].mxu0 %v2352
      %v2543 = vpop.f32.mrb[0].mxu0
      %v2544 = vadd.f32 0.0, %v2543
      %v2545 = vpop.f32.mrb[0].mxu0
      %v2546 = vpop.f32.mrb[0].mxu0
      %v2547 = vadd.f32 0.0, %v2546
      %v2548 = vpop.f32.mrb[0].mxu0
      %2549 = vmatprep.mubr.bf16.mxu0 0
      %2550 = vmatmul.mubr.bf16.gmra.mrb[0].mxu0 %v2353
      %v2551 = vpop.f32.mrb[0].mxu0
      %v2552 = vadd.f32 0.0, %v2551
      %v2553 = vpop.f32.mrb[0].mxu0
      %v2554 = vpop.f32.mrb[0].mxu0
      %v2555 = vadd.f32 0.0, %v2554
      %v2556 = vpop.f32.mrb[0].mxu0
      %2557 = vmatprep.mubr.bf16.mxu0 0
      %2558 = vmatmul.mubr.bf16.gmra.mrb[0].mxu0 %v2354
      %v2559 = vpop.f32.mrb[0].mxu0
      %v2560 = vadd.f32 0.0, %v2559
      %v2561 = vpop.f32.mrb[0].mxu0
      %v2562 = vpop.f32.mrb[0].mxu0
      %v2563 = vadd.f32 0.0, %v2562
      %v2564 = vpop.f32.mrb[0].mxu0
      %2565 = vmatprep.mubr.bf16.mxu0 0
      %2566 = vmatmul.mubr.bf16.gmra.mrb[0].mxu0 %v2355
      %v2567 = vpop.f32.mrb[0].mxu0
      %v2568 = vadd.f32 0.0, %v2567
      %v2569 = vpop.f32.mrb[0].mxu0
      %v2570 = vpop.f32.mrb[0].mxu0
      %v2571 = vadd.f32 0.0, %v2570
      %v2572 = vpop.f32.mrb[0].mxu0
      %2573 = vmatprep.mubr.bf16.mxu0 0
      %2574 = vmatmul.mubr.bf16.gmra.mrb[0].mxu0 %v2356
      %v2575 = vpop.f32.mrb[0].mxu0
      %v2576 = vadd.f32 0.0, %v2575
      %v2577 = vpop.f32.mrb[0].mxu0
      %v2578 = vpop.f32.mrb[0].mxu0
      %v2579 = vadd.f32 0.0, %v2578
      %v2580 = vpop.f32.mrb[0].mxu0
      %2581 = vdwg.mxu0
      %v2598 = vunpack.c.l.b16 %v1556
      %v2599 = vunpack.c.l.b16 %v1557
      %v2600 = vunpack.c.l.b16 %v1558
      %v2601 = vunpack.c.l.b16 %v1559
      %v2602 = vunpack.c.l.b16 %v1560
      %v2603 = vunpack.c.l.b16 %v1561
      %v2604 = vunpack.c.l.b16 %v1562
      %v2605 = vunpack.c.l.b16 %v1563
      %v2606 = vunpack.c.l.b16 %v1564
      %v2607 = vunpack.c.l.b16 %v1565
      %v2608 = vunpack.c.l.b16 %v1566
      %v2609 = vunpack.c.l.b16 %v1567
      %v2610 = vunpack.c.l.b16 %v1568
      %v2611 = vunpack.c.l.b16 %v1569
      %v2612 = vunpack.c.l.b16 %v1570
      %v2613 = vunpack.c.l.b16 %v1571
      %v2614 = vpack.c.b16 %v2599, %v2598
      %v2615 = vpack.c.b16 %v2601, %v2600
      %v2616 = vpack.c.b16 %v2603, %v2602
      %v2617 = vpack.c.b16 %v2605, %v2604
      %v2618 = vpack.c.b16 %v2607, %v2606
      %v2619 = vpack.c.b16 %v2609, %v2608
      %v2620 = vpack.c.b16 %v2611, %v2610
      %v2621 = vpack.c.b16 %v2613, %v2612
      %2630 = vmatprep.subr.bf16.mxu0 0
      %2631 = vmatpush1.bf16.msra.mxu0 %v2614
      %2632 = vmatprep.subr.bf16.mxu0 0
      %2633 = vmatpush1.bf16.msra.mxu0 %v2615
      %2634 = vmatprep.subr.bf16.mxu0 0
      %2635 = vmatpush1.bf16.msra.mxu0 %v2616
      %2636 = vmatprep.subr.bf16.mxu0 0
      %2637 = vmatpush1.bf16.msra.mxu0 %v2617
      %2638 = vmatprep.subr.bf16.mxu0 0
      %2639 = vmatpush1.bf16.msra.mxu0 %v2618
      %2640 = vmatprep.subr.bf16.mxu0 0
      %2641 = vmatpush1.bf16.msra.mxu0 %v2619
      %2642 = vmatprep.subr.bf16.mxu0 0
      %2643 = vmatpush1.bf16.msra.mxu0 %v2620
      %2644 = vmatprep.subr.bf16.mxu0 0
      %2645 = vmatpush1.bf16.msra.mxu0 %v2621
      %2646 = vmatprep.subr.bf16.mxu0 0
      %2647 = vmatpush1.bf16.msra.mxu0 0
      %2648 = vmatprep.subr.bf16.mxu0 0
      %2649 = vmatpush1.bf16.msra.mxu0 0
      %2650 = vmatprep.subr.bf16.mxu0 0
      %2651 = vmatpush1.bf16.msra.mxu0 0
      %2652 = vmatprep.subr.bf16.mxu0 0
      %2653 = vmatpush1.bf16.msra.mxu0 0
      %2654 = vmatprep.subr.bf16.mxu0 0
      %2655 = vmatpush1.bf16.msra.mxu0 0
      %2656 = vmatprep.subr.bf16.mxu0 0
      %2657 = vmatpush1.bf16.msra.mxu0 0
      %2658 = vmatprep.subr.bf16.mxu0 0
      %2659 = vmatpush1.bf16.msra.mxu0 0
      %2660 = vmatprep.subr.bf16.mxu0 0
      %2661 = vmatpush1.bf16.msra.mxu0 0
      %2662 = vmatprep.mubr.bf16.mxu0 0
      %2663 = vmatmul.mubr.bf16.gmra.mrb[0].mxu0 %v1540
      %v2664 = vpop.f32.mrb[0].mxu0
      %v2665 = vadd.f32 %v2456, %v2664
      %v2666 = vpop.f32.mrb[0].mxu0
      %v2667 = vpop.f32.mrb[0].mxu0
      %v2668 = vadd.f32 %v2459, %v2667
      %v2669 = vpop.f32.mrb[0].mxu0
      %2670 = vmatprep.mubr.bf16.mxu0 0
      %2671 = vmatmul.mubr.bf16.gmra.mrb[0].mxu0 %v1541
      %v2672 = vpop.f32.mrb[0].mxu0
      %v2673 = vadd.f32 %v2464, %v2672
      %v2674 = vpop.f32.mrb[0].mxu0
      %v2675 = vpop.f32.mrb[0].mxu0
      %v2676 = vadd.f32 %v2467, %v2675
      %v2677 = vpop.f32.mrb[0].mxu0
      %2678 = vmatprep.mubr.bf16.mxu0 0
      %2679 = vmatmul.mubr.bf16.gmra.mrb[0].mxu0 %v1542
      %v2680 = vpop.f32.mrb[0].mxu0
      %v2681 = vadd.f32 %v2472, %v2680
      %v2682 = vpop.f32.mrb[0].mxu0
      %v2683 = vpop.f32.mrb[0].mxu0
      %v2684 = vadd.f32 %v2475, %v2683
      %v2685 = vpop.f32.mrb[0].mxu0
      %2686 = vmatprep.mubr.bf16.mxu0 0
      %2687 = vmatmul.mubr.bf16.gmra.mrb[0].mxu0 %v1543
      %v2688 = vpop.f32.mrb[0].mxu0
      %v2689 = vadd.f32 %v2480, %v2688
      %v2690 = vpop.f32.mrb[0].mxu0
      %v2691 = vpop.f32.mrb[0].mxu0
      %v2692 = vadd.f32 %v2483, %v2691
      %v2693 = vpop.f32.mrb[0].mxu0
      %2694 = vmatprep.mubr.bf16.mxu0 0
      %2695 = vmatmul.mubr.bf16.gmra.mrb[0].mxu0 %v1544
      %v2696 = vpop.f32.mrb[0].mxu0
      %v2697 = vadd.f32 %v2488, %v2696
      %v2698 = vpop.f32.mrb[0].mxu0
      %v2699 = vpop.f32.mrb[0].mxu0
      %v2700 = vadd.f32 %v2491, %v2699
      %v2701 = vpop.f32.mrb[0].mxu0
      %2702 = vmatprep.mubr.bf16.mxu0 0
      %2703 = vmatmul.mubr.bf16.gmra.mrb[0].mxu0 %v1545
      %v2704 = vpop.f32.mrb[0].mxu0
      %v2705 = vadd.f32 %v2496, %v2704
      %v2706 = vpop.f32.mrb[0].mxu0
      %v2707 = vpop.f32.mrb[0].mxu0
      %v2708 = vadd.f32 %v2499, %v2707
      %v2709 = vpop.f32.mrb[0].mxu0
      %2710 = vmatprep.mubr.bf16.mxu0 0
      %2711 = vmatmul.mubr.bf16.gmra.mrb[0].mxu0 %v1546
      %v2712 = vpop.f32.mrb[0].mxu0
      %v2713 = vadd.f32 %v2504, %v2712
      %v2714 = vpop.f32.mrb[0].mxu0
      %v2715 = vpop.f32.mrb[0].mxu0
      %v2716 = vadd.f32 %v2507, %v2715
      %v2717 = vpop.f32.mrb[0].mxu0
      %2718 = vmatprep.mubr.bf16.mxu0 0
      %2719 = vmatmul.mubr.bf16.gmra.mrb[0].mxu0 %v1547
      %v2720 = vpop.f32.mrb[0].mxu0
      %v2721 = vadd.f32 %v2512, %v2720
      %v2722 = vpop.f32.mrb[0].mxu0
      %v2723 = vpop.f32.mrb[0].mxu0
      %v2724 = vadd.f32 %v2515, %v2723
      %v2725 = vpop.f32.mrb[0].mxu0
      %2726 = vmatprep.mubr.bf16.mxu0 0
      %2727 = vmatmul.mubr.bf16.gmra.mrb[0].mxu0 %v1548
      %v2728 = vpop.f32.mrb[0].mxu0
      %v2729 = vadd.f32 %v2520, %v2728
      %v2730 = vpop.f32.mrb[0].mxu0
      %v2731 = vpop.f32.mrb[0].mxu0
      %v2732 = vadd.f32 %v2523, %v2731
      %v2733 = vpop.f32.mrb[0].mxu0
      %2734 = vmatprep.mubr.bf16.mxu0 0
      %2735 = vmatmul.mubr.bf16.gmra.mrb[0].mxu0 %v1549
      %v2736 = vpop.f32.mrb[0].mxu0
      %v2737 = vadd.f32 %v2528, %v2736
      %v2738 = vpop.f32.mrb[0].mxu0
      %v2739 = vpop.f32.mrb[0].mxu0
      %v2740 = vadd.f32 %v2531, %v2739
      %v2741 = vpop.f32.mrb[0].mxu0
      %2742 = vmatprep.mubr.bf16.mxu0 0
      %2743 = vmatmul.mubr.bf16.gmra.mrb[0].mxu0 %v1550
      %v2744 = vpop.f32.mrb[0].mxu0
      %v2745 = vadd.f32 %v2536, %v2744
      %v2746 = vpop.f32.mrb[0].mxu0
      %v2747 = vpop.f32.mrb[0].mxu0
      %v2748 = vadd.f32 %v2539, %v2747
      %v2749 = vpop.f32.mrb[0].mxu0
      %2750 = vmatprep.mubr.bf16.mxu0 0
      %2751 = vmatmul.mubr.bf16.gmra.mrb[0].mxu0 %v1551
      %v2752 = vpop.f32.mrb[0].mxu0
      %v2753 = vadd.f32 %v2544, %v2752
      %v2754 = vpop.f32.mrb[0].mxu0
      %v2755 = vpop.f32.mrb[0].mxu0
      %v2756 = vadd.f32 %v2547, %v2755
      %v2757 = vpop.f32.mrb[0].mxu0
      %2758 = vmatprep.mubr.bf16.mxu0 0
      %2759 = vmatmul.mubr.bf16.gmra.mrb[0].mxu0 %v1552
      %v2760 = vpop.f32.mrb[0].mxu0
      %v2761 = vadd.f32 %v2552, %v2760
      %v2762 = vpop.f32.mrb[0].mxu0
      %v2763 = vpop.f32.mrb[0].mxu0
      %v2764 = vadd.f32 %v2555, %v2763
      %v2765 = vpop.f32.mrb[0].mxu0
      %2766 = vmatprep.mubr.bf16.mxu0 0
      %2767 = vmatmul.mubr.bf16.gmra.mrb[0].mxu0 %v1553
      %v2768 = vpop.f32.mrb[0].mxu0
      %v2769 = vadd.f32 %v2560, %v2768
      %v2770 = vpop.f32.mrb[0].mxu0
      %v2771 = vpop.f32.mrb[0].mxu0
      %v2772 = vadd.f32 %v2563, %v2771
      %v2773 = vpop.f32.mrb[0].mxu0
      %2774 = vmatprep.mubr.bf16.mxu0 0
      %2775 = vmatmul.mubr.bf16.gmra.mrb[0].mxu0 %v1554
      %v2776 = vpop.f32.mrb[0].mxu0
      %v2777 = vadd.f32 %v2568, %v2776
      %v2778 = vpop.f32.mrb[0].mxu0
      %v2779 = vpop.f32.mrb[0].mxu0
      %v2780 = vadd.f32 %v2571, %v2779
      %v2781 = vpop.f32.mrb[0].mxu0
      %2782 = vmatprep.mubr.bf16.mxu0 0
      %2783 = vmatmul.mubr.bf16.gmra.mrb[0].mxu0 %v1555
      %v2784 = vpop.f32.mrb[0].mxu0
      %v2785 = vadd.f32 %v2576, %v2784
      %v2786 = vpop.f32.mrb[0].mxu0
      %v2787 = vpop.f32.mrb[0].mxu0
      %v2788 = vadd.f32 %v2579, %v2787
      %v2789 = vpop.f32.mrb[0].mxu0
      %2790 = vdwg.mxu0
      %v2791 = vld [vmem:[%s5] sm:$0x1]
      %v2793 = vlaneseq
      %v2794 = vshrl.u32 %v2793, 7
      %v2795 = vsub.s32 0, %v2794
      %v2796 = vrot.slane %v2791, %v2795
      %v2798 = vadd.f32 %v2665, %v2796
      %v2799 = vadd.f32 %v2668, %v2796
      %v2800 = vadd.f32 %v2673, %v2796
      %v2801 = vadd.f32 %v2676, %v2796
      %v2802 = vadd.f32 %v2681, %v2796
      %v2803 = vadd.f32 %v2684, %v2796
      %v2804 = vadd.f32 %v2689, %v2796
      %v2805 = vadd.f32 %v2692, %v2796
      %v2806 = vadd.f32 %v2697, %v2796
      %v2807 = vadd.f32 %v2700, %v2796
      %v2808 = vadd.f32 %v2705, %v2796
      %v2809 = vadd.f32 %v2708, %v2796
      %v2810 = vadd.f32 %v2713, %v2796
      %v2811 = vadd.f32 %v2716, %v2796
      %v2812 = vadd.f32 %v2721, %v2796
      %v2813 = vadd.f32 %v2724, %v2796
      %v2814 = vadd.f32 %v2729, %v2796
      %v2815 = vadd.f32 %v2732, %v2796
      %v2816 = vadd.f32 %v2737, %v2796
      %v2817 = vadd.f32 %v2740, %v2796
      %v2818 = vadd.f32 %v2745, %v2796
      %v2819 = vadd.f32 %v2748, %v2796
      %v2820 = vadd.f32 %v2753, %v2796
      %v2821 = vadd.f32 %v2756, %v2796
      %v2822 = vadd.f32 %v2761, %v2796
      %v2823 = vadd.f32 %v2764, %v2796
      %v2824 = vadd.f32 %v2769, %v2796
      %v2825 = vadd.f32 %v2772, %v2796
      %v2826 = vadd.f32 %v2777, %v2796
      %v2827 = vadd.f32 %v2780, %v2796
      %v2828 = vadd.f32 %v2785, %v2796
      %v2829 = vadd.f32 %v2788, %v2796
      %2830 = vxpose.xlu0.b32.start [1/16] %v2798, 128
      %2831 = vxpose.xlu0.b32.cont [2/16] %v2799, 128
      %2832 = vxpose.xlu0.b32.cont [3/16] %v2800, 128
      %2833 = vxpose.xlu0.b32.cont [4/16] %v2801, 128
      %2834 = vxpose.xlu0.b32.cont [5/16] %v2802, 128
      %2835 = vxpose.xlu0.b32.cont [6/16] %v2803, 128
      %2836 = vxpose.xlu0.b32.cont [7/16] %v2804, 128
      %2837 = vxpose.xlu0.b32.cont [8/16] %v2805, 128
      %2838 = vxpose.xlu0.b32.cont [9/16] %v2806, 128
      %2839 = vxpose.xlu0.b32.cont [10/16] %v2807, 128
      %2840 = vxpose.xlu0.b32.cont [11/16] %v2808, 128
      %2841 = vxpose.xlu0.b32.cont [12/16] %v2809, 128
      %2842 = vxpose.xlu0.b32.cont [13/16] %v2810, 128
      %2843 = vxpose.xlu0.b32.cont [14/16] %v2811, 128
      %2844 = vxpose.xlu0.b32.cont [15/16] %v2812, 128
      %2845 = vxpose.xlu0.b32.end [16/16] %v2813, 128
      %v2846 = vpop.trf.xlu0
      %v2847 = vpop.trf.xlu0
      %v2848 = vpop.trf.xlu0
      %v2849 = vpop.trf.xlu0
      %v2850 = vpop.trf.xlu0
      %v2851 = vpop.trf.xlu0
      %v2852 = vpop.trf.xlu0
      %v2853 = vpop.trf.xlu0
      %v2854 = vpop.trf.xlu0
      %v2855 = vpop.trf.xlu0
      %v2856 = vpop.trf.xlu0
      %v2857 = vpop.trf.xlu0
      %v2858 = vpop.trf.xlu0
      %v2859 = vpop.trf.xlu0
      %v2860 = vpop.trf.xlu0
      %v2861 = vpop.trf.xlu0
      %2862 = vxpose.xlu0.b32.start [1/16] %v2814, 128
      %2863 = vxpose.xlu0.b32.cont [2/16] %v2815, 128
      %2864 = vxpose.xlu0.b32.cont [3/16] %v2816, 128
      %2865 = vxpose.xlu0.b32.cont [4/16] %v2817, 128
      %2866 = vxpose.xlu0.b32.cont [5/16] %v2818, 128
      %2867 = vxpose.xlu0.b32.cont [6/16] %v2819, 128
      %2868 = vxpose.xlu0.b32.cont [7/16] %v2820, 128
      %2869 = vxpose.xlu0.b32.cont [8/16] %v2821, 128
      %2870 = vxpose.xlu0.b32.cont [9/16] %v2822, 128
      %2871 = vxpose.xlu0.b32.cont [10/16] %v2823, 128
      %2872 = vxpose.xlu0.b32.cont [11/16] %v2824, 128
      %2873 = vxpose.xlu0.b32.cont [12/16] %v2825, 128
      %2874 = vxpose.xlu0.b32.cont [13/16] %v2826, 128
      %2875 = vxpose.xlu0.b32.cont [14/16] %v2827, 128
      %2876 = vxpose.xlu0.b32.cont [15/16] %v2828, 128
      %2877 = vxpose.xlu0.b32.end [16/16] %v2829, 128
      %v2878 = vpop.trf.xlu0
      %v2879 = vpop.trf.xlu0
      %v2880 = vpop.trf.xlu0
      %v2881 = vpop.trf.xlu0
      %v2882 = vpop.trf.xlu0
      %v2883 = vpop.trf.xlu0
      %v2884 = vpop.trf.xlu0
      %v2885 = vpop.trf.xlu0
      %v2886 = vpop.trf.xlu0
      %v2887 = vpop.trf.xlu0
      %v2888 = vpop.trf.xlu0
      %v2889 = vpop.trf.xlu0
      %v2890 = vpop.trf.xlu0
      %v2891 = vpop.trf.xlu0
      %v2892 = vpop.trf.xlu0
      %v2893 = vpop.trf.xlu0
      %v2894 = vlaneseq
      %v2895 = vshrl.u32 %v2894, 7
      %v2896 = vxor.u32 %v2846, 2147483648
      %v2897 = vxor.u32 %v2878, 2147483648
      %v2898 = vmul.f32 %v2896, 1.442695
      %v2899 = vpow.pop %v2898
      %v2900 = vmul.f32 %v2897, 1.442695
      %v2901 = vpow.pop %v2900
      %v2902 = vadd.f32 %v2899, 1.0
      %v2903 = vadd.f32 %v2901, 1.0
      %v2904 = vrcp.pop %v2902
      %v2905 = vmul.f32 1.0, %v2904
      %v2906 = vrcp.pop %v2903
      %v2907 = vmul.f32 1.0, %v2906
      %vm2908 = vcmp.eq.s32.totalorder %v2895, 2
      %v2909 = vmul.f32 %v2846, 1.442695
      %v2910 = vpow.pop %v2909
      %v2911 = vmul.f32 %v2878, 1.442695
      %v2912 = vpow.pop %v2911
      %vm2913 = vcmp.eq.s32.totalorder %v2895, 5
      %v2914 = vsel %vm2913, %v2846, %v2905
      %v2915 = vsel %vm2913, %v2878, %v2907
      %v2916 = vsel %vm2908, %v2910, %v2914
      %v2917 = vsel %vm2908, %v2912, %v2915
      %2918 = vst [vmem:[%s273] sm:$0xff] %v2916
      %2919 = vst [vmem:[%s273 + $0x8] sm:$0xff] %v2917
      %s2920 = smul.u32 2, %s22
      %p2921 = scmp.lt.s32.totalorder %s21, 1
      %s2922 = scalar_select %p2921, %s21, 1
      %p2923 = scmp.lt.s32.totalorder %s2920, 1
      %s2924 = scalar_select %p2923, %s2920, 1
      %s2925 = smul.addr %s2922, 2
      %s2926 = sadd.s32 %s2924, %s2925
      %s2927 = smul.addr %s2926, 8
      %s2928 = scalar_lea.vmem %s6, %s2927
      // Predicated region
      $region45: #{run.1} parent=43 // pred_check
        %p2929 = pneg %p180
      $region46: #{run.1} parent=43 // pred_check_branch
        %2931 = sbr.rel (%p2929) target = $region48
      $region47: #{run.1} parent=43 // pred_region
        %s2932 = smul.u32 2, %s22
      $region48: #{run.1} parent=43 // pred_fallthru
        _
    $region44: #{run.1} parent=5 // pred_fallthru
      _
    %p2933 = scmp.le.s32.totalorder 2, %s12
    // Predicated region
    $region49: #{run.1} parent=5 // pred_check
      %p2934 = pneg %p2933
    $region50: #{run.1} parent=5 // pred_check_branch
      %2936 = sbr.rel (%p2934) target = $region52
    $region51: #{run.1} parent=5 // pred_region
      %s2937 = ssub.s32 %s12, 2
      // Predicated region
      $region53: #{run.1} parent=51 // pred_check
        %p2938 = pneg %p186
      $region54: #{run.1} parent=51 // pred_check_branch
        %2940 = sbr.rel (%p2938) target = $region56
      $region55: #{run.1} parent=51 // pred_region
        %s2941 = smul.u32 2, %s24
        %p2942 = scmp.lt.s32.totalorder %s23, 1
        %s2943 = scalar_select %p2942, %s23, 1
        %p2944 = scmp.lt.s32.totalorder %s2941, 1
        %s2945 = scalar_select %p2944, %s2941, 1
        %s2946 = smul.addr %s2943, 2
        %s2947 = sadd.s32 %s2945, %s2946
        %s2948 = smul.addr %s2947, 8
        %s2949 = scalar_lea.vmem %s6, %s2948
      $region56: #{run.1} parent=51 // pred_fallthru
        _
    $region52: #{run.1} parent=5 // pred_fallthru
      _
  $region6: #{run.1} parent=0 // loop_footer
    %s16 = sadd.s32 1, %s12
  $region7: #{run.1} parent=0 // loop_footer_branch
    %11 = sbr.rel target = $region3
  $region8: #{run.1} parent=0 // loop_exit
    _

</llo_original>
